<compile_context>
chip_gen: v7x
topology: tpu7x:2x2x1
jax: 0.10.0
libtpu: 0.0.40
codegen_flags: <defaults>
</compile_context>

<pallas_src>
import math

import jax
import jax.numpy as jnp
from jax import lax
from jax.experimental import pallas as pl
from jax.experimental.pallas import tpu as pltpu


_NT = (((1,), (1,)), ((), ()))   # A @ B^T  (contract last dims of both)
_NN = (((1,), (0,)), ((), ()))   # A @ B


def _make_kernel(n_heads, head_dim, scale, inv_heads, matmul_dtype, need_weights):
    H, D = n_heads, head_dim
    TWO_D = 2 * D

    def _dot(a, b, dims):
        return lax.dot_general(a, b, dimension_numbers=dims,
                               preferred_element_type=jnp.float32)

    def _softmax(s):
        m = jnp.max(s, axis=-1, keepdims=True)
        e = jnp.exp(s - m)
        return e * pl.reciprocal(jnp.sum(e, axis=-1, keepdims=True), approx=True)

    def kernel(xq_ref, xkv_ref, xswap_ref, out_re_ref, out_im_ref, *w_refs):
        if need_weights:
            w_re_ref, w_im_ref = w_refs

        x_q = xq_ref[0]       # [Lq, 2*dm] bf16, per-head [re|im] (query rows)
        x_kv = xkv_ref[0]     # [L , 2*dm] bf16, per-head [re|im] (keys/values)
        x_swap = xswap_ref[0] # [L , 2*dm] bf16, per-head scale*[im|re]

        # Conj-scaled key slab (per-head [scale*re | -scale*im]) hoisted once
        # per grid step: one broadcast multiply over [L, 2*dm] instead of
        # 2*H [L, L] score multiplies.
        lane = lax.broadcasted_iota(jnp.int32, (1, x_kv.shape[1]), 1)
        sign_scale = jnp.where((lane % TWO_D) < D, scale, -scale)
        x_conj = (x_kv.astype(jnp.float32) * sign_scale).astype(matmul_dtype)

        out_re_parts = []
        out_im_parts = []

        for h in range(H):                      # static unroll, H is small
            lo = h * TWO_D
            q_h = x_q[:, lo:lo + TWO_D]         # [Lq, 2D]  ([q_re | q_im])
            kc_h = x_conj[:, lo:lo + TWO_D]     # [L , 2D]  scale*[k_re | -k_im]
            ks_h = x_swap[:, lo:lo + TWO_D]     # [L , 2D]  scale*[k_im |  k_re]
            v_h = x_kv[:, lo:lo + TWO_D]        # [L , 2D]  ([v_re | v_im])

            # S = scale * Q K^T, K-concatenated form (two K=2D matmuls).
            s_re = _dot(q_h, kc_h, _NT)         # [Lq, L] f32
            s_im = _dot(q_h, ks_h, _NT)

            # complex_softmax: independent softmax on real / imag parts (f32).
            w_re = _softmax(s_re)
            w_im = _softmax(s_im)

            if need_weights:
                if h == 0:
                    w_re_ref[0] = w_re
                    w_im_ref[0] = w_im
                else:
                    w_re_ref[0] += w_re
                    w_im_ref[0] += w_im

            # O = W V, N-concatenated RHS (two N=2D matmuls).
            a = _dot(w_re.astype(matmul_dtype), v_h, _NN)   # [Lq, 2D] f32
            b = _dot(w_im.astype(matmul_dtype), v_h, _NN)
            out_re_parts.append(a[:, :D] - b[:, D:])
            out_im_parts.append(a[:, D:] + b[:, :D])

        # Single lane-dense store per output.
        out_re_ref[0] = jnp.concatenate(out_re_parts, axis=-1)
        out_im_ref[0] = jnp.concatenate(out_im_parts, axis=-1)

        if need_weights:
            w_re_ref[0] = w_re_ref[0] * inv_heads
            w_im_ref[0] = w_im_ref[0] * inv_heads

    return kernel


def complex_attention_layer(x, n_heads, scale=None, need_weights=True,
                            matmul_dtype=jnp.bfloat16):
    """x: complex64 [B, L, d_model] -> (output [B, L, d_model] complex64,
                                        attn_weights [B, L, L] complex64)."""
    B, L, dm = x.shape
    H = n_heads if dm % n_heads == 0 else 1
    D = dm // H
    z = float(dm if n_heads == 1 else dm // n_heads)
    scale = float(scale) if scale is not None else 1.0 / math.sqrt(z)

    # Wrapper-side bf16 head-interleaved slabs (halves input DMA vs f32 re/im;
    # per-head [re|im] keeps MXU operand slices 128-lane aligned for D=64).
    x_re = jnp.real(x).astype(jnp.float32).reshape(B, L, H, D)
    x_im = jnp.imag(x).astype(jnp.float32).reshape(B, L, H, D)
    x_cat = jnp.concatenate([x_re, x_im], axis=-1).reshape(B, L, 2 * dm)
    x_cat = x_cat.astype(matmul_dtype)
    x_swap = (scale * jnp.concatenate([x_im, x_re], axis=-1)).reshape(B, L, 2 * dm)
    x_swap = x_swap.astype(matmul_dtype)

    # Query-axis tiling (extra parallel grid dim): keeps the resident set
    # inside v7x's 64 MiB VMEM at large L and feeds both TensorCores.
    Lq = L
    if L > 512:
        for cand in (512, 256, 128):
            if L % cand == 0:
                Lq = cand
                break
    n_q = L // Lq

    kernel = _make_kernel(H, D, scale, 1.0 / H, matmul_dtype, need_weights)

    q_spec = pl.BlockSpec((1, Lq, 2 * dm), lambda b, q: (b, q, 0))
    kv_spec = pl.BlockSpec((1, L, 2 * dm), lambda b, q: (b, 0, 0))
    o_spec = pl.BlockSpec((1, Lq, dm), lambda b, q: (b, q, 0))
    w_spec = pl.BlockSpec((1, Lq, L), lambda b, q: (b, q, 0))

    out_shapes = [jax.ShapeDtypeStruct((B, L, dm), jnp.float32),
                  jax.ShapeDtypeStruct((B, L, dm), jnp.float32)]
    out_specs = [o_spec, o_spec]
    if need_weights:
        out_shapes += [jax.ShapeDtypeStruct((B, L, L), jnp.float32),
                       jax.ShapeDtypeStruct((B, L, L), jnp.float32)]
        out_specs += [w_spec, w_spec]

    # VMEM estimate: double-buffered input slabs, conj slab, double-buffered
    # outputs and weight blocks, plus live per-head [Lq, L] temporaries.
    bm = jnp.dtype(matmul_dtype).itemsize
    est_bytes = (2 * 2 * Lq * 2 * dm * bm        # x_q double buffer
                 + 2 * 2 * 2 * L * 2 * dm * bm   # x_kv + x_swap double buffers
                 + 3 * L * 2 * dm * 4            # conj slab + f32 temp
                 + 2 * 2 * Lq * dm * 4           # out_re / out_im double buffers
                 + (2 * 2 * Lq * L * 4 if need_weights else 0)
                 + 8 * Lq * L * 4                # per-head [Lq, L] live temps
                 + 2 * H * Lq * D * 4)           # collected output parts
    vmem_cap = 128 * 2 ** 20
    try:
        vmem_cap = int(pltpu.get_tpu_info().vmem_capacity_bytes)
    except Exception:
        pass
    vmem_limit = int(min(int(0.85 * vmem_cap),
                         max(2 * est_bytes, 32 * 2 ** 20)))

    results = pl.pallas_call(
        kernel,
        out_shape=tuple(out_shapes),
        grid_spec=pltpu.PrefetchScalarGridSpec(
            num_scalar_prefetch=0,
            grid=(B, n_q),
            in_specs=[q_spec, kv_spec, kv_spec],
            out_specs=tuple(out_specs),
        ),
        compiler_params=pltpu.CompilerParams(
            dimension_semantics=("parallel", "parallel"),
            vmem_limit_bytes=vmem_limit),
    )(x_cat, x_cat, x_swap)

    out = jax.lax.complex(results[0], results[1])
    # TODO(synk): complex_dropout is identity here (p=0.0 / eval); nonzero
    # dropout would need pltpu.prng_seed/prng_random_bits inside the kernel.
    if need_weights:
        attn = jax.lax.complex(results[2], results[3])
        return out, attn
    return out


def _ref_complex_attention(x, n_heads):
    """Pure-JAX (f32/complex64) reference matching the PyTorch forward."""
    B, L, dm = x.shape
    H = n_heads if dm % n_heads == 0 else 1
    D = dm // H
    z = float(dm if n_heads == 1 else dm // n_heads)
    scale = 1.0 / math.sqrt(z)
    q = x.reshape(B, L, H, D)
    s = jnp.einsum('nlhd,nshd->nhls', q, q) * scale
    w = jax.lax.complex(jax.nn.softmax(jnp.real(s), axis=-1),
                        jax.nn.softmax(jnp.imag(s), axis=-1))
    out = jnp.einsum('nhls,nshd->nlhd', w, q).reshape(B, L, dm)
    aw = jnp.mean(jnp.transpose(w, (0, 2, 1, 3)), axis=-2)
    return out, aw


if __name__ == "__main__":
    key = jax.random.PRNGKey(0)
    B, L, d_model, n_heads = 2, 8, 32, 4
    k_re, k_im = jax.random.split(key)
    x = jax.lax.complex(
        jax.random.normal(k_re, (B, L, d_model), dtype=jnp.float32),
        jax.random.normal(k_im, (B, L, d_model), dtype=jnp.float32),
    )

    out, attn = complex_attention_layer(x, n_heads)
    out, attn = jax.block_until_ready((out, attn))

    ref_out, ref_attn = _ref_complex_attention(x, n_heads)
    assert out.shape == (B, L, d_model) and attn.shape == (B, L, L)
    # bf16 MXU operands are a deliberate perf/numerics trade-off; the
    # K-/N-concatenated forms remove the Gauss cancellation, so tolerances are
    # tighter than before while staying comfortably safe.
    assert jnp.allclose(out, ref_out, atol=5e-2, rtol=5e-2)
    assert jnp.allclose(attn, ref_attn, atol=2e-2, rtol=2e-2)
    print("KERNEL_OK")
</pallas_src>

<mosaic_0001>
module attributes {stable_mosaic.version = 11 : i64} {
  func.func @kernel(%arg0: i32, %arg1: i32, %arg2: memref<1x8x64xbf16, #tpu.memory_space<vmem>>, %arg3: memref<1x8x64xbf16, #tpu.memory_space<vmem>>, %arg4: memref<1x8x64xbf16, #tpu.memory_space<vmem>>, %arg5: memref<1x8x32xf32, #tpu.memory_space<vmem>>, %arg6: memref<1x8x32xf32, #tpu.memory_space<vmem>>, %arg7: memref<1x8x8xf32, #tpu.memory_space<vmem>>, %arg8: memref<1x8x8xf32, #tpu.memory_space<vmem>>) attributes {dimension_semantics = [#tpu.dimension_semantics<parallel>, #tpu.dimension_semantics<parallel>], iteration_bounds = array<i64: 2, 1>, scalar_prefetch = 0 : i64, scratch_operands = 0 : i64, tpu.core_type = #tpu.core_type<tc>, window_params = [{transform_indices = @transform_0, window_bounds = array<i64: 1, 8, 64>}, {transform_indices = @transform_1, window_bounds = array<i64: 1, 8, 64>}, {transform_indices = @transform_2, window_bounds = array<i64: 1, 8, 64>}, {transform_indices = @transform_3, window_bounds = array<i64: 1, 8, 32>}, {transform_indices = @transform_4, window_bounds = array<i64: 1, 8, 32>}, {transform_indices = @transform_5, window_bounds = array<i64: 1, 8, 8>}, {transform_indices = @transform_6, window_bounds = array<i64: 1, 8, 8>}]} {
    %c0 = arith.constant 0 : index
    %c0_0 = arith.constant 0 : index
    %c0_1 = arith.constant 0 : index
    %0 = vector.load %arg2[%c0, %c0_0, %c0_1] : memref<1x8x64xbf16, #tpu.memory_space<vmem>>, vector<1x8x64xbf16>
    %1 = vector.shape_cast %0 : vector<1x8x64xbf16> to vector<8x64xbf16>
    %c0_2 = arith.constant 0 : index
    %c0_3 = arith.constant 0 : index
    %c0_4 = arith.constant 0 : index
    %2 = vector.load %arg3[%c0_2, %c0_3, %c0_4] : memref<1x8x64xbf16, #tpu.memory_space<vmem>>, vector<1x8x64xbf16>
    %3 = vector.shape_cast %2 : vector<1x8x64xbf16> to vector<8x64xbf16>
    %c0_5 = arith.constant 0 : index
    %c0_6 = arith.constant 0 : index
    %c0_7 = arith.constant 0 : index
    %4 = vector.load %arg4[%c0_5, %c0_6, %c0_7] : memref<1x8x64xbf16, #tpu.memory_space<vmem>>, vector<1x8x64xbf16>
    %5 = vector.shape_cast %4 : vector<1x8x64xbf16> to vector<8x64xbf16>
    %6 = tpu.iota {dimensions = array<i32: 1>} : vector<1x64xi32>
    %c16_i32 = arith.constant 16 : i32
    %c0_i32 = arith.constant 0 : i32
    %7 = arith.cmpi eq, %c16_i32, %c0_i32 : i32
    %c1_i32 = arith.constant 1 : i32
    %8 = arith.select %7, %c1_i32, %c16_i32 : i32
    %9 = vector.broadcast %8 : i32 to vector<1x64xi32>
    %10 = arith.remsi %6, %9 : vector<1x64xi32>
    %c0_i32_8 = arith.constant 0 : i32
    %11 = vector.broadcast %c0_i32_8 : i32 to vector<1x64xi32>
    %12 = arith.cmpi ne, %10, %11 : vector<1x64xi32>
    %c0_i32_9 = arith.constant 0 : i32
    %13 = vector.broadcast %c0_i32_9 : i32 to vector<1x64xi32>
    %14 = arith.cmpi slt, %10, %13 : vector<1x64xi32>
    %c0_i32_10 = arith.constant 0 : i32
    %15 = arith.cmpi slt, %8, %c0_i32_10 : i32
    %16 = vector.broadcast %15 : i1 to vector<1x64xi1>
    %17 = vector.broadcast %16 : vector<1x64xi1> to vector<1x64xi1>
    %18 = arith.xori %14, %17 : vector<1x64xi1>
    %19 = arith.andi %18, %12 : vector<1x64xi1>
    %20 = vector.broadcast %8 : i32 to vector<1x64xi32>
    %21 = arith.addi %10, %20 : vector<1x64xi32>
    %22 = arith.select %19, %21, %10 : vector<1x64xi1>, vector<1x64xi32>
    %c8_i32 = arith.constant 8 : i32
    %23 = vector.broadcast %c8_i32 : i32 to vector<1x64xi32>
    %24 = arith.cmpi slt, %22, %23 : vector<1x64xi32>
    %cst = arith.constant 0.353553385 : f32
    %cst_11 = arith.constant -0.353553385 : f32
    %25 = vector.broadcast %cst : f32 to vector<1x64xf32>
    %26 = vector.broadcast %cst_11 : f32 to vector<1x64xf32>
    %27 = arith.select %24, %25, %26 : vector<1x64xi1>, vector<1x64xf32>
    %28 = arith.extf %3 : vector<8x64xbf16> to vector<8x64xf32>
    %29 = vector.broadcast %27 : vector<1x64xf32> to vector<8x64xf32>
    %30 = arith.mulf %28, %29 : vector<8x64xf32>
    %31 = arith.truncf %30 : vector<8x64xf32> to vector<8x64xbf16>
    %32 = vector.extract_strided_slice %1 {offsets = [0, 0], sizes = [8, 16], strides = [1, 1]} : vector<8x64xbf16> to vector<8x16xbf16>
    %33 = vector.extract_strided_slice %31 {offsets = [0, 0], sizes = [8, 16], strides = [1, 1]} : vector<8x64xbf16> to vector<8x16xbf16>
    %34 = vector.extract_strided_slice %5 {offsets = [0, 0], sizes = [8, 16], strides = [1, 1]} : vector<8x64xbf16> to vector<8x16xbf16>
    %35 = vector.extract_strided_slice %3 {offsets = [0, 0], sizes = [8, 16], strides = [1, 1]} : vector<8x64xbf16> to vector<8x16xbf16>
    %cst_12 = arith.constant dense<0.000000e+00> : vector<8x8xf32>
    %36 = tpu.matmul %32, %33, %cst_12 {dimension_numbers = #tpu.dot_dimension_numbers<[1], [1], [0], [0], [0, 0, 1, 0], [], []>} : vector<8x16xbf16>, vector<8x16xbf16>, vector<8x8xf32> -> vector<8x8xf32>
    %cst_13 = arith.constant dense<0.000000e+00> : vector<8x8xf32>
    %37 = tpu.matmul %32, %34, %cst_13 {dimension_numbers = #tpu.dot_dimension_numbers<[1], [1], [0], [0], [0, 0, 1, 0], [], []>} : vector<8x16xbf16>, vector<8x16xbf16>, vector<8x8xf32> -> vector<8x8xf32>
    %cst_14 = arith.constant dense<0xFF800000> : vector<8xf32>
    %38 = vector.multi_reduction <maximumf>, %36, %cst_14 [1] : vector<8x8xf32> to vector<8xf32>
    %39 = vector.shape_cast %38 : vector<8xf32> to vector<8x1xf32>
    %40 = vector.broadcast %39 : vector<8x1xf32> to vector<8x8xf32>
    %41 = arith.subf %36, %40 : vector<8x8xf32>
    %42 = math.exp %41 : vector<8x8xf32>
    %cst_15 = arith.constant dense<0.000000e+00> : vector<8xf32>
    %43 = vector.multi_reduction <add>, %42, %cst_15 [1] : vector<8x8xf32> to vector<8xf32>
    %44 = vector.shape_cast %43 : vector<8xf32> to vector<8x1xf32>
    %45 = tpu.reciprocal %44 {approx = true} : vector<8x1xf32> -> vector<8x1xf32>
    %46 = vector.broadcast %45 : vector<8x1xf32> to vector<8x8xf32>
    %47 = arith.mulf %42, %46 : vector<8x8xf32>
    %cst_16 = arith.constant dense<0xFF800000> : vector<8xf32>
    %48 = vector.multi_reduction <maximumf>, %37, %cst_16 [1] : vector<8x8xf32> to vector<8xf32>
    %49 = vector.shape_cast %48 : vector<8xf32> to vector<8x1xf32>
    %50 = vector.broadcast %49 : vector<8x1xf32> to vector<8x8xf32>
    %51 = arith.subf %37, %50 : vector<8x8xf32>
    %52 = math.exp %51 : vector<8x8xf32>
    %cst_17 = arith.constant dense<0.000000e+00> : vector<8xf32>
    %53 = vector.multi_reduction <add>, %52, %cst_17 [1] : vector<8x8xf32> to vector<8xf32>
    %54 = vector.shape_cast %53 : vector<8xf32> to vector<8x1xf32>
    %55 = tpu.reciprocal %54 {approx = true} : vector<8x1xf32> -> vector<8x1xf32>
    %56 = vector.broadcast %55 : vector<8x1xf32> to vector<8x8xf32>
    %57 = arith.mulf %52, %56 : vector<8x8xf32>
    %c0_18 = arith.constant 0 : index
    %c0_19 = arith.constant 0 : index
    %c0_20 = arith.constant 0 : index
    %58 = vector.load %arg7[%c0_18, %c0_19, %c0_20] : memref<1x8x8xf32, #tpu.memory_space<vmem>>, vector<1x8x8xf32>
    %59 = vector.shape_cast %58 : vector<1x8x8xf32> to vector<8x8xf32>
    %60 = vector.shape_cast %47 : vector<8x8xf32> to vector<1x8x8xf32>
    tpu.vector_store %arg7[%c0_18, %c0_19, %c0_20], %60 {strides = array<i32>} : memref<1x8x8xf32, #tpu.memory_space<vmem>>, vector<1x8x8xf32>,
    %c0_21 = arith.constant 0 : index
    %c0_22 = arith.constant 0 : index
    %c0_23 = arith.constant 0 : index
    %61 = vector.load %arg8[%c0_21, %c0_22, %c0_23] : memref<1x8x8xf32, #tpu.memory_space<vmem>>, vector<1x8x8xf32>
    %62 = vector.shape_cast %61 : vector<1x8x8xf32> to vector<8x8xf32>
    %63 = vector.shape_cast %57 : vector<8x8xf32> to vector<1x8x8xf32>
    tpu.vector_store %arg8[%c0_21, %c0_22, %c0_23], %63 {strides = array<i32>} : memref<1x8x8xf32, #tpu.memory_space<vmem>>, vector<1x8x8xf32>,
    %64 = arith.truncf %47 : vector<8x8xf32> to vector<8x8xbf16>
    %cst_24 = arith.constant dense<0.000000e+00> : vector<8x16xf32>
    %65 = tpu.matmul %64, %35, %cst_24 {dimension_numbers = #tpu.dot_dimension_numbers<[1], [0], [0], [1], [0, 0, 1, 1], [], []>} : vector<8x8xbf16>, vector<8x16xbf16>, vector<8x16xf32> -> vector<8x16xf32>
    %66 = arith.truncf %57 : vector<8x8xf32> to vector<8x8xbf16>
    %cst_25 = arith.constant dense<0.000000e+00> : vector<8x16xf32>
    %67 = tpu.matmul %66, %35, %cst_25 {dimension_numbers = #tpu.dot_dimension_numbers<[1], [0], [0], [1], [0, 0, 1, 1], [], []>} : vector<8x8xbf16>, vector<8x16xbf16>, vector<8x16xf32> -> vector<8x16xf32>
    %68 = vector.extract_strided_slice %65 {offsets = [0, 0], sizes = [8, 8], strides = [1, 1]} : vector<8x16xf32> to vector<8x8xf32>
    %69 = vector.extract_strided_slice %67 {offsets = [0, 8], sizes = [8, 8], strides = [1, 1]} : vector<8x16xf32> to vector<8x8xf32>
    %70 = arith.subf %68, %69 : vector<8x8xf32>
    %71 = vector.extract_strided_slice %65 {offsets = [0, 8], sizes = [8, 8], strides = [1, 1]} : vector<8x16xf32> to vector<8x8xf32>
    %72 = vector.extract_strided_slice %67 {offsets = [0, 0], sizes = [8, 8], strides = [1, 1]} : vector<8x16xf32> to vector<8x8xf32>
    %73 = arith.addf %71, %72 : vector<8x8xf32>
    %74 = vector.extract_strided_slice %1 {offsets = [0, 16], sizes = [8, 16], strides = [1, 1]} : vector<8x64xbf16> to vector<8x16xbf16>
    %75 = vector.extract_strided_slice %31 {offsets = [0, 16], sizes = [8, 16], strides = [1, 1]} : vector<8x64xbf16> to vector<8x16xbf16>
    %76 = vector.extract_strided_slice %5 {offsets = [0, 16], sizes = [8, 16], strides = [1, 1]} : vector<8x64xbf16> to vector<8x16xbf16>
    %77 = vector.extract_strided_slice %3 {offsets = [0, 16], sizes = [8, 16], strides = [1, 1]} : vector<8x64xbf16> to vector<8x16xbf16>
    %cst_26 = arith.constant dense<0.000000e+00> : vector<8x8xf32>
    %78 = tpu.matmul %74, %75, %cst_26 {dimension_numbers = #tpu.dot_dimension_numbers<[1], [1], [0], [0], [0, 0, 1, 0], [], []>} : vector<8x16xbf16>, vector<8x16xbf16>, vector<8x8xf32> -> vector<8x8xf32>
    %cst_27 = arith.constant dense<0.000000e+00> : vector<8x8xf32>
    %79 = tpu.matmul %74, %76, %cst_27 {dimension_numbers = #tpu.dot_dimension_numbers<[1], [1], [0], [0], [0, 0, 1, 0], [], []>} : vector<8x16xbf16>, vector<8x16xbf16>, vector<8x8xf32> -> vector<8x8xf32>
    %cst_28 = arith.constant dense<0xFF800000> : vector<8xf32>
    %80 = vector.multi_reduction <maximumf>, %78, %cst_28 [1] : vector<8x8xf32> to vector<8xf32>
    %81 = vector.shape_cast %80 : vector<8xf32> to vector<8x1xf32>
    %82 = vector.broadcast %81 : vector<8x1xf32> to vector<8x8xf32>
    %83 = arith.subf %78, %82 : vector<8x8xf32>
    %84 = math.exp %83 : vector<8x8xf32>
    %cst_29 = arith.constant dense<0.000000e+00> : vector<8xf32>
    %85 = vector.multi_reduction <add>, %84, %cst_29 [1] : vector<8x8xf32> to vector<8xf32>
    %86 = vector.shape_cast %85 : vector<8xf32> to vector<8x1xf32>
    %87 = tpu.reciprocal %86 {approx = true} : vector<8x1xf32> -> vector<8x1xf32>
    %88 = vector.broadcast %87 : vector<8x1xf32> to vector<8x8xf32>
    %89 = arith.mulf %84, %88 : vector<8x8xf32>
    %cst_30 = arith.constant dense<0xFF800000> : vector<8xf32>
    %90 = vector.multi_reduction <maximumf>, %79, %cst_30 [1] : vector<8x8xf32> to vector<8xf32>
    %91 = vector.shape_cast %90 : vector<8xf32> to vector<8x1xf32>
    %92 = vector.broadcast %91 : vector<8x1xf32> to vector<8x8xf32>
    %93 = arith.subf %79, %92 : vector<8x8xf32>
    %94 = math.exp %93 : vector<8x8xf32>
    %cst_31 = arith.constant dense<0.000000e+00> : vector<8xf32>
    %95 = vector.multi_reduction <add>, %94, %cst_31 [1] : vector<8x8xf32> to vector<8xf32>
    %96 = vector.shape_cast %95 : vector<8xf32> to vector<8x1xf32>
    %97 = tpu.reciprocal %96 {approx = true} : vector<8x1xf32> -> vector<8x1xf32>
    %98 = vector.broadcast %97 : vector<8x1xf32> to vector<8x8xf32>
    %99 = arith.mulf %94, %98 : vector<8x8xf32>
    %c0_32 = arith.constant 0 : index
    %c0_33 = arith.constant 0 : index
    %c0_34 = arith.constant 0 : index
    %100 = vector.load %arg7[%c0_32, %c0_33, %c0_34] : memref<1x8x8xf32, #tpu.memory_space<vmem>>, vector<1x8x8xf32>
    %101 = vector.shape_cast %100 : vector<1x8x8xf32> to vector<8x8xf32>
    %102 = arith.addf %101, %89 : vector<8x8xf32>
    %c0_35 = arith.constant 0 : index
    %c0_36 = arith.constant 0 : index
    %c0_37 = arith.constant 0 : index
    %103 = vector.load %arg7[%c0_35, %c0_36, %c0_37] : memref<1x8x8xf32, #tpu.memory_space<vmem>>, vector<1x8x8xf32>
    %104 = vector.shape_cast %103 : vector<1x8x8xf32> to vector<8x8xf32>
    %105 = vector.shape_cast %102 : vector<8x8xf32> to vector<1x8x8xf32>
    tpu.vector_store %arg7[%c0_35, %c0_36, %c0_37], %105 {strides = array<i32>} : memref<1x8x8xf32, #tpu.memory_space<vmem>>, vector<1x8x8xf32>,
    %c0_38 = arith.constant 0 : index
    %c0_39 = arith.constant 0 : index
    %c0_40 = arith.constant 0 : index
    %106 = vector.load %arg8[%c0_38, %c0_39, %c0_40] : memref<1x8x8xf32, #tpu.memory_space<vmem>>, vector<1x8x8xf32>
    %107 = vector.shape_cast %106 : vector<1x8x8xf32> to vector<8x8xf32>
    %108 = arith.addf %107, %99 : vector<8x8xf32>
    %c0_41 = arith.constant 0 : index
    %c0_42 = arith.constant 0 : index
    %c0_43 = arith.constant 0 : index
    %109 = vector.load %arg8[%c0_41, %c0_42, %c0_43] : memref<1x8x8xf32, #tpu.memory_space<vmem>>, vector<1x8x8xf32>
    %110 = vector.shape_cast %109 : vector<1x8x8xf32> to vector<8x8xf32>
    %111 = vector.shape_cast %108 : vector<8x8xf32> to vector<1x8x8xf32>
    tpu.vector_store %arg8[%c0_41, %c0_42, %c0_43], %111 {strides = array<i32>} : memref<1x8x8xf32, #tpu.memory_space<vmem>>, vector<1x8x8xf32>,
    %112 = arith.truncf %89 : vector<8x8xf32> to vector<8x8xbf16>
    %cst_44 = arith.constant dense<0.000000e+00> : vector<8x16xf32>
    %113 = tpu.matmul %112, %77, %cst_44 {dimension_numbers = #tpu.dot_dimension_numbers<[1], [0], [0], [1], [0, 0, 1, 1], [], []>} : vector<8x8xbf16>, vector<8x16xbf16>, vector<8x16xf32> -> vector<8x16xf32>
    %114 = arith.truncf %99 : vector<8x8xf32> to vector<8x8xbf16>
    %cst_45 = arith.constant dense<0.000000e+00> : vector<8x16xf32>
    %115 = tpu.matmul %114, %77, %cst_45 {dimension_numbers = #tpu.dot_dimension_numbers<[1], [0], [0], [1], [0, 0, 1, 1], [], []>} : vector<8x8xbf16>, vector<8x16xbf16>, vector<8x16xf32> -> vector<8x16xf32>
    %116 = vector.extract_strided_slice %113 {offsets = [0, 0], sizes = [8, 8], strides = [1, 1]} : vector<8x16xf32> to vector<8x8xf32>
    %117 = vector.extract_strided_slice %115 {offsets = [0, 8], sizes = [8, 8], strides = [1, 1]} : vector<8x16xf32> to vector<8x8xf32>
    %118 = arith.subf %116, %117 : vector<8x8xf32>
    %119 = vector.extract_strided_slice %113 {offsets = [0, 8], sizes = [8, 8], strides = [1, 1]} : vector<8x16xf32> to vector<8x8xf32>
    %120 = vector.extract_strided_slice %115 {offsets = [0, 0], sizes = [8, 8], strides = [1, 1]} : vector<8x16xf32> to vector<8x8xf32>
    %121 = arith.addf %119, %120 : vector<8x8xf32>
    %122 = vector.extract_strided_slice %1 {offsets = [0, 32], sizes = [8, 16], strides = [1, 1]} : vector<8x64xbf16> to vector<8x16xbf16>
    %123 = vector.extract_strided_slice %31 {offsets = [0, 32], sizes = [8, 16], strides = [1, 1]} : vector<8x64xbf16> to vector<8x16xbf16>
    %124 = vector.extract_strided_slice %5 {offsets = [0, 32], sizes = [8, 16], strides = [1, 1]} : vector<8x64xbf16> to vector<8x16xbf16>
    %125 = vector.extract_strided_slice %3 {offsets = [0, 32], sizes = [8, 16], strides = [1, 1]} : vector<8x64xbf16> to vector<8x16xbf16>
    %cst_46 = arith.constant dense<0.000000e+00> : vector<8x8xf32>
    %126 = tpu.matmul %122, %123, %cst_46 {dimension_numbers = #tpu.dot_dimension_numbers<[1], [1], [0], [0], [0, 0, 1, 0], [], []>} : vector<8x16xbf16>, vector<8x16xbf16>, vector<8x8xf32> -> vector<8x8xf32>
    %cst_47 = arith.constant dense<0.000000e+00> : vector<8x8xf32>
    %127 = tpu.matmul %122, %124, %cst_47 {dimension_numbers = #tpu.dot_dimension_numbers<[1], [1], [0], [0], [0, 0, 1, 0], [], []>} : vector<8x16xbf16>, vector<8x16xbf16>, vector<8x8xf32> -> vector<8x8xf32>
    %cst_48 = arith.constant dense<0xFF800000> : vector<8xf32>
    %128 = vector.multi_reduction <maximumf>, %126, %cst_48 [1] : vector<8x8xf32> to vector<8xf32>
    %129 = vector.shape_cast %128 : vector<8xf32> to vector<8x1xf32>
    %130 = vector.broadcast %129 : vector<8x1xf32> to vector<8x8xf32>
    %131 = arith.subf %126, %130 : vector<8x8xf32>
    %132 = math.exp %131 : vector<8x8xf32>
    %cst_49 = arith.constant dense<0.000000e+00> : vector<8xf32>
    %133 = vector.multi_reduction <add>, %132, %cst_49 [1] : vector<8x8xf32> to vector<8xf32>
    %134 = vector.shape_cast %133 : vector<8xf32> to vector<8x1xf32>
    %135 = tpu.reciprocal %134 {approx = true} : vector<8x1xf32> -> vector<8x1xf32>
    %136 = vector.broadcast %135 : vector<8x1xf32> to vector<8x8xf32>
    %137 = arith.mulf %132, %136 : vector<8x8xf32>
    %cst_50 = arith.constant dense<0xFF800000> : vector<8xf32>
    %138 = vector.multi_reduction <maximumf>, %127, %cst_50 [1] : vector<8x8xf32> to vector<8xf32>
    %139 = vector.shape_cast %138 : vector<8xf32> to vector<8x1xf32>
    %140 = vector.broadcast %139 : vector<8x1xf32> to vector<8x8xf32>
    %141 = arith.subf %127, %140 : vector<8x8xf32>
    %142 = math.exp %141 : vector<8x8xf32>
    %cst_51 = arith.constant dense<0.000000e+00> : vector<8xf32>
    %143 = vector.multi_reduction <add>, %142, %cst_51 [1] : vector<8x8xf32> to vector<8xf32>
    %144 = vector.shape_cast %143 : vector<8xf32> to vector<8x1xf32>
    %145 = tpu.reciprocal %144 {approx = true} : vector<8x1xf32> -> vector<8x1xf32>
    %146 = vector.broadcast %145 : vector<8x1xf32> to vector<8x8xf32>
    %147 = arith.mulf %142, %146 : vector<8x8xf32>
    %c0_52 = arith.constant 0 : index
    %c0_53 = arith.constant 0 : index
    %c0_54 = arith.constant 0 : index
    %148 = vector.load %arg7[%c0_52, %c0_53, %c0_54] : memref<1x8x8xf32, #tpu.memory_space<vmem>>, vector<1x8x8xf32>
    %149 = vector.shape_cast %148 : vector<1x8x8xf32> to vector<8x8xf32>
    %150 = arith.addf %149, %137 : vector<8x8xf32>
    %c0_55 = arith.constant 0 : index
    %c0_56 = arith.constant 0 : index
    %c0_57 = arith.constant 0 : index
    %151 = vector.load %arg7[%c0_55, %c0_56, %c0_57] : memref<1x8x8xf32, #tpu.memory_space<vmem>>, vector<1x8x8xf32>
    %152 = vector.shape_cast %151 : vector<1x8x8xf32> to vector<8x8xf32>
    %153 = vector.shape_cast %150 : vector<8x8xf32> to vector<1x8x8xf32>
    tpu.vector_store %arg7[%c0_55, %c0_56, %c0_57], %153 {strides = array<i32>} : memref<1x8x8xf32, #tpu.memory_space<vmem>>, vector<1x8x8xf32>,
    %c0_58 = arith.constant 0 : index
    %c0_59 = arith.constant 0 : index
    %c0_60 = arith.constant 0 : index
    %154 = vector.load %arg8[%c0_58, %c0_59, %c0_60] : memref<1x8x8xf32, #tpu.memory_space<vmem>>, vector<1x8x8xf32>
    %155 = vector.shape_cast %154 : vector<1x8x8xf32> to vector<8x8xf32>
    %156 = arith.addf %155, %147 : vector<8x8xf32>
    %c0_61 = arith.constant 0 : index
    %c0_62 = arith.constant 0 : index
    %c0_63 = arith.constant 0 : index
    %157 = vector.load %arg8[%c0_61, %c0_62, %c0_63] : memref<1x8x8xf32, #tpu.memory_space<vmem>>, vector<1x8x8xf32>
    %158 = vector.shape_cast %157 : vector<1x8x8xf32> to vector<8x8xf32>
    %159 = vector.shape_cast %156 : vector<8x8xf32> to vector<1x8x8xf32>
    tpu.vector_store %arg8[%c0_61, %c0_62, %c0_63], %159 {strides = array<i32>} : memref<1x8x8xf32, #tpu.memory_space<vmem>>, vector<1x8x8xf32>,
    %160 = arith.truncf %137 : vector<8x8xf32> to vector<8x8xbf16>
    %cst_64 = arith.constant dense<0.000000e+00> : vector<8x16xf32>
    %161 = tpu.matmul %160, %125, %cst_64 {dimension_numbers = #tpu.dot_dimension_numbers<[1], [0], [0], [1], [0, 0, 1, 1], [], []>} : vector<8x8xbf16>, vector<8x16xbf16>, vector<8x16xf32> -> vector<8x16xf32>
    %162 = arith.truncf %147 : vector<8x8xf32> to vector<8x8xbf16>
    %cst_65 = arith.constant dense<0.000000e+00> : vector<8x16xf32>
    %163 = tpu.matmul %162, %125, %cst_65 {dimension_numbers = #tpu.dot_dimension_numbers<[1], [0], [0], [1], [0, 0, 1, 1], [], []>} : vector<8x8xbf16>, vector<8x16xbf16>, vector<8x16xf32> -> vector<8x16xf32>
    %164 = vector.extract_strided_slice %161 {offsets = [0, 0], sizes = [8, 8], strides = [1, 1]} : vector<8x16xf32> to vector<8x8xf32>
    %165 = vector.extract_strided_slice %163 {offsets = [0, 8], sizes = [8, 8], strides = [1, 1]} : vector<8x16xf32> to vector<8x8xf32>
    %166 = arith.subf %164, %165 : vector<8x8xf32>
    %167 = vector.extract_strided_slice %161 {offsets = [0, 8], sizes = [8, 8], strides = [1, 1]} : vector<8x16xf32> to vector<8x8xf32>
    %168 = vector.extract_strided_slice %163 {offsets = [0, 0], sizes = [8, 8], strides = [1, 1]} : vector<8x16xf32> to vector<8x8xf32>
    %169 = arith.addf %167, %168 : vector<8x8xf32>
    %170 = vector.extract_strided_slice %1 {offsets = [0, 48], sizes = [8, 16], strides = [1, 1]} : vector<8x64xbf16> to vector<8x16xbf16>
    %171 = vector.extract_strided_slice %31 {offsets = [0, 48], sizes = [8, 16], strides = [1, 1]} : vector<8x64xbf16> to vector<8x16xbf16>
    %172 = vector.extract_strided_slice %5 {offsets = [0, 48], sizes = [8, 16], strides = [1, 1]} : vector<8x64xbf16> to vector<8x16xbf16>
    %173 = vector.extract_strided_slice %3 {offsets = [0, 48], sizes = [8, 16], strides = [1, 1]} : vector<8x64xbf16> to vector<8x16xbf16>
    %cst_66 = arith.constant dense<0.000000e+00> : vector<8x8xf32>
    %174 = tpu.matmul %170, %171, %cst_66 {dimension_numbers = #tpu.dot_dimension_numbers<[1], [1], [0], [0], [0, 0, 1, 0], [], []>} : vector<8x16xbf16>, vector<8x16xbf16>, vector<8x8xf32> -> vector<8x8xf32>
    %cst_67 = arith.constant dense<0.000000e+00> : vector<8x8xf32>
    %175 = tpu.matmul %170, %172, %cst_67 {dimension_numbers = #tpu.dot_dimension_numbers<[1], [1], [0], [0], [0, 0, 1, 0], [], []>} : vector<8x16xbf16>, vector<8x16xbf16>, vector<8x8xf32> -> vector<8x8xf32>
    %cst_68 = arith.constant dense<0xFF800000> : vector<8xf32>
    %176 = vector.multi_reduction <maximumf>, %174, %cst_68 [1] : vector<8x8xf32> to vector<8xf32>
    %177 = vector.shape_cast %176 : vector<8xf32> to vector<8x1xf32>
    %178 = vector.broadcast %177 : vector<8x1xf32> to vector<8x8xf32>
    %179 = arith.subf %174, %178 : vector<8x8xf32>
    %180 = math.exp %179 : vector<8x8xf32>
    %cst_69 = arith.constant dense<0.000000e+00> : vector<8xf32>
    %181 = vector.multi_reduction <add>, %180, %cst_69 [1] : vector<8x8xf32> to vector<8xf32>
    %182 = vector.shape_cast %181 : vector<8xf32> to vector<8x1xf32>
    %183 = tpu.reciprocal %182 {approx = true} : vector<8x1xf32> -> vector<8x1xf32>
    %184 = vector.broadcast %183 : vector<8x1xf32> to vector<8x8xf32>
    %185 = arith.mulf %180, %184 : vector<8x8xf32>
    %cst_70 = arith.constant dense<0xFF800000> : vector<8xf32>
    %186 = vector.multi_reduction <maximumf>, %175, %cst_70 [1] : vector<8x8xf32> to vector<8xf32>
    %187 = vector.shape_cast %186 : vector<8xf32> to vector<8x1xf32>
    %188 = vector.broadcast %187 : vector<8x1xf32> to vector<8x8xf32>
    %189 = arith.subf %175, %188 : vector<8x8xf32>
    %190 = math.exp %189 : vector<8x8xf32>
    %cst_71 = arith.constant dense<0.000000e+00> : vector<8xf32>
    %191 = vector.multi_reduction <add>, %190, %cst_71 [1] : vector<8x8xf32> to vector<8xf32>
    %192 = vector.shape_cast %191 : vector<8xf32> to vector<8x1xf32>
    %193 = tpu.reciprocal %192 {approx = true} : vector<8x1xf32> -> vector<8x1xf32>
    %194 = vector.broadcast %193 : vector<8x1xf32> to vector<8x8xf32>
    %195 = arith.mulf %190, %194 : vector<8x8xf32>
    %c0_72 = arith.constant 0 : index
    %c0_73 = arith.constant 0 : index
    %c0_74 = arith.constant 0 : index
    %196 = vector.load %arg7[%c0_72, %c0_73, %c0_74] : memref<1x8x8xf32, #tpu.memory_space<vmem>>, vector<1x8x8xf32>
    %197 = vector.shape_cast %196 : vector<1x8x8xf32> to vector<8x8xf32>
    %198 = arith.addf %197, %185 : vector<8x8xf32>
    %c0_75 = arith.constant 0 : index
    %c0_76 = arith.constant 0 : index
    %c0_77 = arith.constant 0 : index
    %199 = vector.load %arg7[%c0_75, %c0_76, %c0_77] : memref<1x8x8xf32, #tpu.memory_space<vmem>>, vector<1x8x8xf32>
    %200 = vector.shape_cast %199 : vector<1x8x8xf32> to vector<8x8xf32>
    %201 = vector.shape_cast %198 : vector<8x8xf32> to vector<1x8x8xf32>
    tpu.vector_store %arg7[%c0_75, %c0_76, %c0_77], %201 {strides = array<i32>} : memref<1x8x8xf32, #tpu.memory_space<vmem>>, vector<1x8x8xf32>,
    %c0_78 = arith.constant 0 : index
    %c0_79 = arith.constant 0 : index
    %c0_80 = arith.constant 0 : index
    %202 = vector.load %arg8[%c0_78, %c0_79, %c0_80] : memref<1x8x8xf32, #tpu.memory_space<vmem>>, vector<1x8x8xf32>
    %203 = vector.shape_cast %202 : vector<1x8x8xf32> to vector<8x8xf32>
    %204 = arith.addf %203, %195 : vector<8x8xf32>
    %c0_81 = arith.constant 0 : index
    %c0_82 = arith.constant 0 : index
    %c0_83 = arith.constant 0 : index
    %205 = vector.load %arg8[%c0_81, %c0_82, %c0_83] : memref<1x8x8xf32, #tpu.memory_space<vmem>>, vector<1x8x8xf32>
    %206 = vector.shape_cast %205 : vector<1x8x8xf32> to vector<8x8xf32>
    %207 = vector.shape_cast %204 : vector<8x8xf32> to vector<1x8x8xf32>
    tpu.vector_store %arg8[%c0_81, %c0_82, %c0_83], %207 {strides = array<i32>} : memref<1x8x8xf32, #tpu.memory_space<vmem>>, vector<1x8x8xf32>,
    %208 = arith.truncf %185 : vector<8x8xf32> to vector<8x8xbf16>
    %cst_84 = arith.constant dense<0.000000e+00> : vector<8x16xf32>
    %209 = tpu.matmul %208, %173, %cst_84 {dimension_numbers = #tpu.dot_dimension_numbers<[1], [0], [0], [1], [0, 0, 1, 1], [], []>} : vector<8x8xbf16>, vector<8x16xbf16>, vector<8x16xf32> -> vector<8x16xf32>
    %210 = arith.truncf %195 : vector<8x8xf32> to vector<8x8xbf16>
    %cst_85 = arith.constant dense<0.000000e+00> : vector<8x16xf32>
    %211 = tpu.matmul %210, %173, %cst_85 {dimension_numbers = #tpu.dot_dimension_numbers<[1], [0], [0], [1], [0, 0, 1, 1], [], []>} : vector<8x8xbf16>, vector<8x16xbf16>, vector<8x16xf32> -> vector<8x16xf32>
    %212 = vector.extract_strided_slice %209 {offsets = [0, 0], sizes = [8, 8], strides = [1, 1]} : vector<8x16xf32> to vector<8x8xf32>
    %213 = vector.extract_strided_slice %211 {offsets = [0, 8], sizes = [8, 8], strides = [1, 1]} : vector<8x16xf32> to vector<8x8xf32>
    %214 = arith.subf %212, %213 : vector<8x8xf32>
    %215 = vector.extract_strided_slice %209 {offsets = [0, 8], sizes = [8, 8], strides = [1, 1]} : vector<8x16xf32> to vector<8x8xf32>
    %216 = vector.extract_strided_slice %211 {offsets = [0, 0], sizes = [8, 8], strides = [1, 1]} : vector<8x16xf32> to vector<8x8xf32>
    %217 = arith.addf %215, %216 : vector<8x8xf32>
    %218 = tpu.concatenate %70, %118, %166, %214 in 1 : vector<8x8xf32>, vector<8x8xf32>, vector<8x8xf32>, vector<8x8xf32> -> vector<8x32xf32>
    %c0_86 = arith.constant 0 : index
    %c0_87 = arith.constant 0 : index
    %c0_88 = arith.constant 0 : index
    %219 = vector.load %arg5[%c0_86, %c0_87, %c0_88] : memref<1x8x32xf32, #tpu.memory_space<vmem>>, vector<1x8x32xf32>
    %220 = vector.shape_cast %219 : vector<1x8x32xf32> to vector<8x32xf32>
    %221 = vector.shape_cast %218 : vector<8x32xf32> to vector<1x8x32xf32>
    tpu.vector_store %arg5[%c0_86, %c0_87, %c0_88], %221 {strides = array<i32>} : memref<1x8x32xf32, #tpu.memory_space<vmem>>, vector<1x8x32xf32>,
    %222 = tpu.concatenate %73, %121, %169, %217 in 1 : vector<8x8xf32>, vector<8x8xf32>, vector<8x8xf32>, vector<8x8xf32> -> vector<8x32xf32>
    %c0_89 = arith.constant 0 : index
    %c0_90 = arith.constant 0 : index
    %c0_91 = arith.constant 0 : index
    %223 = vector.load %arg6[%c0_89, %c0_90, %c0_91] : memref<1x8x32xf32, #tpu.memory_space<vmem>>, vector<1x8x32xf32>
    %224 = vector.shape_cast %223 : vector<1x8x32xf32> to vector<8x32xf32>
    %225 = vector.shape_cast %222 : vector<8x32xf32> to vector<1x8x32xf32>
    tpu.vector_store %arg6[%c0_89, %c0_90, %c0_91], %225 {strides = array<i32>} : memref<1x8x32xf32, #tpu.memory_space<vmem>>, vector<1x8x32xf32>,
    %c0_92 = arith.constant 0 : index
    %c0_93 = arith.constant 0 : index
    %c0_94 = arith.constant 0 : index
    %226 = vector.load %arg7[%c0_92, %c0_93, %c0_94] : memref<1x8x8xf32, #tpu.memory_space<vmem>>, vector<1x8x8xf32>
    %227 = vector.shape_cast %226 : vector<1x8x8xf32> to vector<8x8xf32>
    %cst_95 = arith.constant 2.500000e-01 : f32
    %228 = vector.broadcast %cst_95 : f32 to vector<8x8xf32>
    %229 = arith.mulf %227, %228 : vector<8x8xf32>
    %c0_96 = arith.constant 0 : index
    %c0_97 = arith.constant 0 : index
    %c0_98 = arith.constant 0 : index
    %230 = vector.load %arg7[%c0_96, %c0_97, %c0_98] : memref<1x8x8xf32, #tpu.memory_space<vmem>>, vector<1x8x8xf32>
    %231 = vector.shape_cast %230 : vector<1x8x8xf32> to vector<8x8xf32>
    %232 = vector.shape_cast %229 : vector<8x8xf32> to vector<1x8x8xf32>
    tpu.vector_store %arg7[%c0_96, %c0_97, %c0_98], %232 {strides = array<i32>} : memref<1x8x8xf32, #tpu.memory_space<vmem>>, vector<1x8x8xf32>,
    %c0_99 = arith.constant 0 : index
    %c0_100 = arith.constant 0 : index
    %c0_101 = arith.constant 0 : index
    %233 = vector.load %arg8[%c0_99, %c0_100, %c0_101] : memref<1x8x8xf32, #tpu.memory_space<vmem>>, vector<1x8x8xf32>
    %234 = vector.shape_cast %233 : vector<1x8x8xf32> to vector<8x8xf32>
    %cst_102 = arith.constant 2.500000e-01 : f32
    %235 = vector.broadcast %cst_102 : f32 to vector<8x8xf32>
    %236 = arith.mulf %234, %235 : vector<8x8xf32>
    %c0_103 = arith.constant 0 : index
    %c0_104 = arith.constant 0 : index
    %c0_105 = arith.constant 0 : index
    %237 = vector.load %arg8[%c0_103, %c0_104, %c0_105] : memref<1x8x8xf32, #tpu.memory_space<vmem>>, vector<1x8x8xf32>
    %238 = vector.shape_cast %237 : vector<1x8x8xf32> to vector<8x8xf32>
    %239 = vector.shape_cast %236 : vector<8x8xf32> to vector<1x8x8xf32>
    tpu.vector_store %arg8[%c0_103, %c0_104, %c0_105], %239 {strides = array<i32>} : memref<1x8x8xf32, #tpu.memory_space<vmem>>, vector<1x8x8xf32>,
    return
  }
  func.func @transform_0(%arg0: i32, %arg1: i32) -> (i32, i32, i32) {
    %c0_i32 = arith.constant 0 : i32
    %c0_i32_0 = arith.constant 0 : i32
    return %arg0, %arg1, %c0_i32 : i32, i32, i32
  }
  func.func @transform_1(%arg0: i32, %arg1: i32) -> (i32, i32, i32) {
    %c0_i32 = arith.constant 0 : i32
    %c0_i32_0 = arith.constant 0 : i32
    %c0_i32_1 = arith.constant 0 : i32
    return %arg0, %c0_i32, %c0_i32_0 : i32, i32, i32
  }
  func.func @transform_2(%arg0: i32, %arg1: i32) -> (i32, i32, i32) {
    %c0_i32 = arith.constant 0 : i32
    %c0_i32_0 = arith.constant 0 : i32
    %c0_i32_1 = arith.constant 0 : i32
    return %arg0, %c0_i32, %c0_i32_0 : i32, i32, i32
  }
  func.func @transform_3(%arg0: i32, %arg1: i32) -> (i32, i32, i32) {
    %c0_i32 = arith.constant 0 : i32
    %c0_i32_0 = arith.constant 0 : i32
    return %arg0, %arg1, %c0_i32 : i32, i32, i32
  }
  func.func @transform_4(%arg0: i32, %arg1: i32) -> (i32, i32, i32) {
    %c0_i32 = arith.constant 0 : i32
    %c0_i32_0 = arith.constant 0 : i32
    return %arg0, %arg1, %c0_i32 : i32, i32, i32
  }
  func.func @transform_5(%arg0: i32, %arg1: i32) -> (i32, i32, i32) {
    %c0_i32 = arith.constant 0 : i32
    %c0_i32_0 = arith.constant 0 : i32
    return %arg0, %arg1, %c0_i32 : i32, i32, i32
  }
  func.func @transform_6(%arg0: i32, %arg1: i32) -> (i32, i32, i32) {
    %c0_i32 = arith.constant 0 : i32
    %c0_i32_0 = arith.constant 0 : i32
    return %arg0, %arg1, %c0_i32 : i32, i32, i32
  }
}

</mosaic_0001>

<llo_original>
// kernel: tpu_custom_call.1
$region0: #{tpu_custom_call.1}
  #allocation0 [shape = 'u32[]', space=smem, size = 0x4, offset = 0x4, fixed_abs, tag = 'smem constant byte address 0x4 - core index']
  #allocation1 [shape = 'u32[144,128]{1,0:T(1,128)}', space=vmem, size = 0x12000, scoped, tag = 'internal scratch']
  %s0 = inlined_call_operand.hbm [shape: bf16[2,8,64], index: 0, kind: input, shape index: {}]
  %s1 = inlined_call_operand.hbm [shape: bf16[2,8,64], index: 1, kind: input, shape index: {}]
  %s2 = inlined_call_operand.hbm [shape: bf16[2,8,64], index: 2, kind: input, shape index: {}]
  %s3 = inlined_call_operand.hbm [shape: f32[2,8,32], index: 3, kind: output, shape index: {0}]
  %s4 = inlined_call_operand.hbm [shape: f32[2,8,32], index: 4, kind: output, shape index: {1}]
  %s5 = inlined_call_operand.hbm [shape: f32[2,8,8], index: 5, kind: output, shape index: {2}]
  %s6 = inlined_call_operand.hbm [shape: f32[2,8,8], index: 6, kind: output, shape index: {3}]
  %7 = xla_tuple %s3, %s4, %s5, %s6
  %s8 = sld [smem:[#allocation0]]
  $region81: #{tpu_custom_call.1} parent=0
    _
  %s10 = ssub.s32 1, %s8
  %s11 = scalar_select 0, %s10, %s8
  $region1: #{tpu_custom_call.1} parent=0
    #allocation2 [shape = 'u8[4096]{0}', space=vmem, size = 0x1000, scoped, tag = 'input window, operand 0']
    #allocation3 [shape = 's32[2]{0}', space=sflag, size = 0x8, scoped, tag = 'scoped memory for tpu_custom_call.1']
    #allocation4 [shape = 's32[2]{0}', space=sflag, size = 0x8, scoped, tag = 'scoped memory for tpu_custom_call.1']
    #allocation5 [shape = 'u8[4096]{0}', space=vmem, size = 0x1000, scoped, tag = 'input window, operand 1']
    #allocation6 [shape = 's32[2]{0}', space=sflag, size = 0x8, scoped, tag = 'scoped memory for tpu_custom_call.1']
    #allocation7 [shape = 'u8[4096]{0}', space=vmem, size = 0x1000, scoped, tag = 'input window, operand 2']
    #allocation8 [shape = 'u8[8192]{0}', space=vmem, size = 0x2000, scoped, tag = 'output window, operand 0']
    #allocation9 [shape = 'u8[8192]{0}', space=vmem, size = 0x2000, scoped, tag = 'output window, operand 1']
    #allocation10 [shape = 's32[2]{0}', space=sflag, size = 0x8, scoped, tag = 'scoped memory for tpu_custom_call.1']
    #allocation11 [shape = 'u8[8192]{0}', space=vmem, size = 0x2000, scoped, tag = 'output window, operand 2']
    #allocation12 [shape = 'u8[8192]{0}', space=vmem, size = 0x2000, scoped, tag = 'output window, operand 3']
    #allocation13 [shape = 's32[2]{0}', space=sflag, size = 0x8, scoped, tag = 'scoped memory for tpu_custom_call.1']
    %12 = vsyncpa [#allocation3], 0
    %s13 = scalar_lea.sflag [#allocation3], 1
    %14 = vsyncpa %s13, 0
    %15 = vsyncpa [#allocation6], 0
    %s16 = scalar_lea.sflag [#allocation6], 1
    %17 = vsyncpa %s16, 0
    %18 = vsyncpa [#allocation4], 0
    %s19 = scalar_lea.sflag [#allocation4], 1
    %20 = vsyncpa %s19, 0
    %21 = vsyncpa [#allocation10], 0
    %s22 = scalar_lea.sflag [#allocation10], 1
    %23 = vsyncpa %s22, 0
    %24 = vsyncpa [#allocation13], 0
    %s25 = scalar_lea.sflag [#allocation13], 1
    %26 = vsyncpa %s25, 0
    loop: start=0, step=1, limit=4
    $region2: #{tpu_custom_call.1} parent=1 // loop_pre_header
      _
    $region3: #{tpu_custom_call.1} parent=1 // loop_header
      %s28 = sphi 0, %s32
      %p29 = scmp.ge.s32.totalorder %s28, 4
      %s35 = sphi 0, %s47
      %s36 = sphi 0, %s43
      %s37 = sphi 0, %s35
      %s38 = sphi 0, %s36
      %s39 = sphi 0, %s37
      %s40 = sphi 0, %s38
      %s52 = sphi 0, %s54
      %s55 = sphi 0, %s52
      %s56 = sphi 0, %s55
      %s72 = sphi 0, %s56
      %s78 = sphi 0, %s80
      %s81 = sphi 0, %s78
      %s82 = sphi 0, %s81
      %s98 = sphi 0, %s82
      %s104 = sphi 0, %s106
      %s107 = sphi 0, %s104
      %s108 = sphi 0, %s107
      %s124 = sphi 0, %s108
      %s132 = sphi 0, %s134
      %s135 = sphi 0, %s132
      %s136 = sphi 0, %s135
      %s152 = sphi 0, %s136
      %s160 = sphi 0, %s162
      %s163 = sphi 0, %s160
      %s164 = sphi 0, %s163
      %s180 = sphi 0, %s164
      %s188 = sphi 0, %s190
      %s191 = sphi 0, %s188
      %s192 = sphi 0, %s191
      %s208 = sphi 0, %s192
      %s216 = sphi 0, %s218
      %s219 = sphi 0, %s216
      %s220 = sphi 0, %s219
      %s236 = sphi 0, %s220
    $region4: #{tpu_custom_call.1} parent=1 // loop_header_branch
      %31 = sbr.rel (%p29) target = $region8
    $region5: #{tpu_custom_call.1} parent=1 // loop_body
      %s33 = ssub.s32 %s28, 1
      %s34 = ssub.s32 %s28, 2
      %s41 = sadd.s32 1, %s36
      %p42 = scmp.ge.s32.totalorder %s41, 1
      %s43 = scalar_select %p42, 0, %s41
      %s44 = sadd.s32 1, %s35
      %s45 = scalar_select %p42, %s44, %s35
      %p46 = scmp.ge.s32.totalorder %s45, 2
      %s47 = scalar_select %p46, 0, %s45
      %s48 = ssub.s32 %s35, %s47
      %s49 = ssub.s32 %s36, %s43
      %s50 = sor.u32 %s48, %s49
      %p51 = scmp.eq.s32.totalorder %s50, 0
      %s53 = sadd.s32 %s52, 1
      %s54 = scalar_select %p51, %s52, %s53
      %p57 = pneg %p51
      %p58 = scmp.eq.s32.totalorder %s28, 1
      %p59 = por %p57, %p58
      %p60 = scmp.ne.s32.totalorder %s52, %s55
      %p61 = scmp.eq.s32.totalorder %s28, 0
      %p62 = por %p60, %p61
      %p63 = scmp.ne.s32.totalorder %s52, %s55
      %p64 = scmp.eq.s32.totalorder %s33, 1
      %p65 = por %p63, %p64
      %p66 = scmp.ne.s32.totalorder %s55, %s56
      %p67 = scmp.eq.s32.totalorder %s33, 0
      %p68 = por %p66, %p67
      %p69 = scmp.ne.s32.totalorder %s55, %s56
      %p70 = scmp.eq.s32.totalorder %s34, 1
      %p71 = por %p69, %p70
      %p73 = scmp.ne.s32.totalorder %s56, %s72
      %p74 = scmp.eq.s32.totalorder %s34, 0
      %p75 = por %p73, %p74
      %s76 = ssub.s32 %s35, %s47
      %p77 = scmp.eq.s32.totalorder %s76, 0
      %s79 = sadd.s32 %s78, 1
      %s80 = scalar_select %p77, %s78, %s79
      %p83 = pneg %p77
      %p84 = scmp.eq.s32.totalorder %s28, 1
      %p85 = por %p83, %p84
      %p86 = scmp.ne.s32.totalorder %s78, %s81
      %p87 = scmp.eq.s32.totalorder %s28, 0
      %p88 = por %p86, %p87
      %p89 = scmp.ne.s32.totalorder %s78, %s81
      %p90 = scmp.eq.s32.totalorder %s33, 1
      %p91 = por %p89, %p90
      %p92 = scmp.ne.s32.totalorder %s81, %s82
      %p93 = scmp.eq.s32.totalorder %s33, 0
      %p94 = por %p92, %p93
      %p95 = scmp.ne.s32.totalorder %s81, %s82
      %p96 = scmp.eq.s32.totalorder %s34, 1
      %p97 = por %p95, %p96
      %p99 = scmp.ne.s32.totalorder %s82, %s98
      %p100 = scmp.eq.s32.totalorder %s34, 0
      %p101 = por %p99, %p100
      %s102 = ssub.s32 %s35, %s47
      %p103 = scmp.eq.s32.totalorder %s102, 0
      %s105 = sadd.s32 %s104, 1
      %s106 = scalar_select %p103, %s104, %s105
      %p109 = pneg %p103
      %p110 = scmp.eq.s32.totalorder %s28, 1
      %p111 = por %p109, %p110
      %p112 = scmp.ne.s32.totalorder %s104, %s107
      %p113 = scmp.eq.s32.totalorder %s28, 0
      %p114 = por %p112, %p113
      %p115 = scmp.ne.s32.totalorder %s104, %s107
      %p116 = scmp.eq.s32.totalorder %s33, 1
      %p117 = por %p115, %p116
      %p118 = scmp.ne.s32.totalorder %s107, %s108
      %p119 = scmp.eq.s32.totalorder %s33, 0
      %p120 = por %p118, %p119
      %p121 = scmp.ne.s32.totalorder %s107, %s108
      %p122 = scmp.eq.s32.totalorder %s34, 1
      %p123 = por %p121, %p122
      %p125 = scmp.ne.s32.totalorder %s108, %s124
      %p126 = scmp.eq.s32.totalorder %s34, 0
      %p127 = por %p125, %p126
      %s128 = ssub.s32 %s35, %s47
      %s129 = ssub.s32 %s36, %s43
      %s130 = sor.u32 %s128, %s129
      %p131 = scmp.eq.s32.totalorder %s130, 0
      %s133 = sadd.s32 %s132, 1
      %s134 = scalar_select %p131, %s132, %s133
      %p137 = pneg %p131
      %p138 = scmp.eq.s32.totalorder %s28, 1
      %p139 = por %p137, %p138
      %p140 = scmp.ne.s32.totalorder %s132, %s135
      %p141 = scmp.eq.s32.totalorder %s28, 0
      %p142 = por %p140, %p141
      %p143 = scmp.ne.s32.totalorder %s132, %s135
      %p144 = scmp.eq.s32.totalorder %s33, 1
      %p145 = por %p143, %p144
      %p146 = scmp.ne.s32.totalorder %s135, %s136
      %p147 = scmp.eq.s32.totalorder %s33, 0
      %p148 = por %p146, %p147
      %p149 = scmp.ne.s32.totalorder %s135, %s136
      %p150 = scmp.eq.s32.totalorder %s34, 1
      %p151 = por %p149, %p150
      %p153 = scmp.ne.s32.totalorder %s136, %s152
      %p154 = scmp.eq.s32.totalorder %s34, 0
      %p155 = por %p153, %p154
      %s156 = ssub.s32 %s35, %s47
      %s157 = ssub.s32 %s36, %s43
      %s158 = sor.u32 %s156, %s157
      %p159 = scmp.eq.s32.totalorder %s158, 0
      %s161 = sadd.s32 %s160, 1
      %s162 = scalar_select %p159, %s160, %s161
      %p165 = pneg %p159
      %p166 = scmp.eq.s32.totalorder %s28, 1
      %p167 = por %p165, %p166
      %p168 = scmp.ne.s32.totalorder %s160, %s163
      %p169 = scmp.eq.s32.totalorder %s28, 0
      %p170 = por %p168, %p169
      %p171 = scmp.ne.s32.totalorder %s160, %s163
      %p172 = scmp.eq.s32.totalorder %s33, 1
      %p173 = por %p171, %p172
      %p174 = scmp.ne.s32.totalorder %s163, %s164
      %p175 = scmp.eq.s32.totalorder %s33, 0
      %p176 = por %p174, %p175
      %p177 = scmp.ne.s32.totalorder %s163, %s164
      %p178 = scmp.eq.s32.totalorder %s34, 1
      %p179 = por %p177, %p178
      %p181 = scmp.ne.s32.totalorder %s164, %s180
      %p182 = scmp.eq.s32.totalorder %s34, 0
      %p183 = por %p181, %p182
      %s184 = ssub.s32 %s35, %s47
      %s185 = ssub.s32 %s36, %s43
      %s186 = sor.u32 %s184, %s185
      %p187 = scmp.eq.s32.totalorder %s186, 0
      %s189 = sadd.s32 %s188, 1
      %s190 = scalar_select %p187, %s188, %s189
      %p193 = pneg %p187
      %p194 = scmp.eq.s32.totalorder %s28, 1
      %p195 = por %p193, %p194
      %p196 = scmp.ne.s32.totalorder %s188, %s191
      %p197 = scmp.eq.s32.totalorder %s28, 0
      %p198 = por %p196, %p197
      %p199 = scmp.ne.s32.totalorder %s188, %s191
      %p200 = scmp.eq.s32.totalorder %s33, 1
      %p201 = por %p199, %p200
      %p202 = scmp.ne.s32.totalorder %s191, %s192
      %p203 = scmp.eq.s32.totalorder %s33, 0
      %p204 = por %p202, %p203
      %p205 = scmp.ne.s32.totalorder %s191, %s192
      %p206 = scmp.eq.s32.totalorder %s34, 1
      %p207 = por %p205, %p206
      %p209 = scmp.ne.s32.totalorder %s192, %s208
      %p210 = scmp.eq.s32.totalorder %s34, 0
      %p211 = por %p209, %p210
      %s212 = ssub.s32 %s35, %s47
      %s213 = ssub.s32 %s36, %s43
      %s214 = sor.u32 %s212, %s213
      %p215 = scmp.eq.s32.totalorder %s214, 0
      %s217 = sadd.s32 %s216, 1
      %s218 = scalar_select %p215, %s216, %s217
      %p221 = pneg %p215
      %p222 = scmp.eq.s32.totalorder %s28, 1
      %p223 = por %p221, %p222
      %p224 = scmp.ne.s32.totalorder %s216, %s219
      %p225 = scmp.eq.s32.totalorder %s28, 0
      %p226 = por %p224, %p225
      %p227 = scmp.ne.s32.totalorder %s216, %s219
      %p228 = scmp.eq.s32.totalorder %s33, 1
      %p229 = por %p227, %p228
      %p230 = scmp.ne.s32.totalorder %s219, %s220
      %p231 = scmp.eq.s32.totalorder %s33, 0
      %p232 = por %p230, %p231
      %p233 = scmp.ne.s32.totalorder %s219, %s220
      %p234 = scmp.eq.s32.totalorder %s34, 1
      %p235 = por %p233, %p234
      %p237 = scmp.ne.s32.totalorder %s220, %s236
      %p238 = scmp.eq.s32.totalorder %s34, 0
      %p239 = por %p237, %p238
      %p240 = scmp.le.s32.totalorder 1, %s28
      %p241 = scmp.lt.s32.totalorder %s28, 3
      %p242 = pnand %p240, %p241
      %p243 = pneg %p242
      // Predicated region
      $region9: #{tpu_custom_call.1} parent=5 // pred_check
        _
      $region10: #{tpu_custom_call.1} parent=5 // pred_check_branch
        %245 = sbr.rel (%p242) target = $region12
      $region11: #{tpu_custom_call.1} parent=5 // pred_region
        %s246 = ssub.s32 %s28, 1
      $region12: #{tpu_custom_call.1} parent=5 // pred_fallthru
        _
      %p247 = scmp.lt.s32.totalorder %s28, 2
      // Predicated region
      $region13: #{tpu_custom_call.1} parent=5 // pred_check
        %p248 = pneg %p247
      $region14: #{tpu_custom_call.1} parent=5 // pred_check_branch
        %250 = sbr.rel (%p248) target = $region16
      $region15: #{tpu_custom_call.1} parent=5 // pred_region
        // Predicated region
        $region17: #{tpu_custom_call.1} parent=15 // pred_check
          %p251 = pneg %p62
        $region18: #{tpu_custom_call.1} parent=15 // pred_check_branch
          %253 = sbr.rel (%p251) target = $region20
        $region19: #{tpu_custom_call.1} parent=15 // pred_region
          %s254 = sand.u32 %s52, 1
          %s255 = scalar_lea.sflag [#allocation3], %s254
          %s256 = sand.u32 %s52, 1
          %s257 = smul.addr %s256, 4
          %s258 = scalar_lea.vmem [#allocation2], %s257
          %s260 = ssub.s32 64, 64
          %261 = vsyncadd %s255, %s260
          %s262 = sadd.s32 %s36, %s35
          %s263 = smul.addr %s262, 64
          %s264 = scalar_lea.hbm %s0, %s263
          %s266 = sshll.u32 %s258, 4
          %s267 = int_to_ptr.vmem [resolvable:$true] %s266
          %269 = dma.hbm_to_vmem [thread:$0]  %s264, 64, %s267, %s255
        $region20: #{tpu_custom_call.1} parent=15 // pred_fallthru
          _
        // Predicated region
        $region21: #{tpu_custom_call.1} parent=15 // pred_check
          %p270 = pneg %p88
        $region22: #{tpu_custom_call.1} parent=15 // pred_check_branch
          %272 = sbr.rel (%p270) target = $region24
        $region23: #{tpu_custom_call.1} parent=15 // pred_region
          %s273 = sand.u32 %s28, 1
          %s274 = scalar_lea.sflag [#allocation6], %s273
          %s275 = sand.u32 %s78, 1
          %s276 = smul.addr %s275, 4
          %s277 = scalar_lea.vmem [#allocation5], %s276
          %s279 = ssub.s32 64, 64
          %280 = vsyncadd %s274, %s279
          %s281 = smul.addr %s35, 64
          %s282 = scalar_lea.hbm %s1, %s281
          %s284 = sshll.u32 %s277, 4
          %s285 = int_to_ptr.vmem [resolvable:$true] %s284
          %287 = dma.hbm_to_vmem [thread:$0]  %s282, 64, %s285, %s274
        $region24: #{tpu_custom_call.1} parent=15 // pred_fallthru
          _
        // Predicated region
        $region25: #{tpu_custom_call.1} parent=15 // pred_check
          %p288 = pneg %p114
        $region26: #{tpu_custom_call.1} parent=15 // pred_check_branch
          %290 = sbr.rel (%p288) target = $region28
        $region27: #{tpu_custom_call.1} parent=15 // pred_region
          %s291 = sand.u32 %s28, 1
          %s292 = scalar_lea.sflag [#allocation6], %s291
          %s293 = sand.u32 %s104, 1
          %s294 = smul.addr %s293, 4
          %s295 = scalar_lea.vmem [#allocation7], %s294
          %s297 = ssub.s32 64, 64
          %298 = vsyncadd %s292, %s297
          %s299 = smul.addr %s35, 64
          %s300 = scalar_lea.hbm %s2, %s299
          %s302 = sshll.u32 %s295, 4
          %s303 = int_to_ptr.vmem [resolvable:$true] %s302
          %305 = dma.hbm_to_vmem [thread:$0]  %s300, 64, %s303, %s292
        $region28: #{tpu_custom_call.1} parent=15 // pred_fallthru
          _
      $region16: #{tpu_custom_call.1} parent=5 // pred_fallthru
        _
      %p306 = scmp.le.s32.totalorder 1, %s28
      %p307 = scmp.lt.s32.totalorder %s28, 3
      %p308 = pnand %p306, %p307
      %p309 = pneg %p308
      // Predicated region
      $region29: #{tpu_custom_call.1} parent=5 // pred_check
        _
      $region30: #{tpu_custom_call.1} parent=5 // pred_check_branch
        %311 = sbr.rel (%p308) target = $region32
      $region31: #{tpu_custom_call.1} parent=5 // pred_region
        %s312 = ssub.s32 %s28, 1
        %s313 = sand.u32 %s55, 1
        %s314 = scalar_lea.sflag [#allocation3], %s313
        %s315 = sand.u32 %s55, 1
        %s316 = smul.addr %s315, 4
        %s317 = scalar_lea.vmem [#allocation2], %s316
        // Predicated region
        $region33: #{tpu_custom_call.1} parent=31 // pred_check
          %p318 = pneg %p68
        $region34: #{tpu_custom_call.1} parent=31 // pred_check_branch
          %320 = sbr.rel (%p318) target = $region36
        $region35: #{tpu_custom_call.1} parent=31 // pred_region
          %321 = dma.done %s314, 64
        $region36: #{tpu_custom_call.1} parent=31 // pred_fallthru
          _
        %s322 = sand.u32 %s33, 1
        %s323 = scalar_lea.sflag [#allocation6], %s322
        %s324 = sand.u32 %s81, 1
        %s325 = smul.addr %s324, 4
        %s326 = scalar_lea.vmem [#allocation5], %s325
        // Predicated region
        $region37: #{tpu_custom_call.1} parent=31 // pred_check
          %p327 = pneg %p94
        $region38: #{tpu_custom_call.1} parent=31 // pred_check_branch
          %329 = sbr.rel (%p327) target = $region40
        $region39: #{tpu_custom_call.1} parent=31 // pred_region
          %330 = dma.done %s323, 64
        $region40: #{tpu_custom_call.1} parent=31 // pred_fallthru
          _
        %s331 = sand.u32 %s33, 1
        %s332 = scalar_lea.sflag [#allocation6], %s331
        %s333 = sand.u32 %s107, 1
        %s334 = smul.addr %s333, 4
        %s335 = scalar_lea.vmem [#allocation7], %s334
        // Predicated region
        $region41: #{tpu_custom_call.1} parent=31 // pred_check
          %p336 = pneg %p120
        $region42: #{tpu_custom_call.1} parent=31 // pred_check_branch
          %338 = sbr.rel (%p336) target = $region44
        $region43: #{tpu_custom_call.1} parent=31 // pred_region
          %339 = dma.done %s332, 64
        $region44: #{tpu_custom_call.1} parent=31 // pred_fallthru
          _
        %s340 = sand.u32 %s55, 1
        %s341 = scalar_lea.sflag [#allocation3], %s340
        %s342 = sand.u32 %s55, 1
        %s343 = smul.addr %s342, 4
        %s344 = scalar_lea.vmem [#allocation2], %s343
        %p345 = pneg %p68
        %p346 = pneg %p65
        %s347 = sand.u32 %s33, 1
        %s348 = scalar_lea.sflag [#allocation6], %s347
        %s349 = sand.u32 %s81, 1
        %s350 = smul.addr %s349, 4
        %s351 = scalar_lea.vmem [#allocation5], %s350
        %p352 = pneg %p94
        %p353 = pneg %p91
        %s354 = sand.u32 %s33, 1
        %s355 = scalar_lea.sflag [#allocation6], %s354
        %s356 = sand.u32 %s107, 1
        %s357 = smul.addr %s356, 4
        %s358 = scalar_lea.vmem [#allocation7], %s357
        %p359 = pneg %p120
        %p360 = pneg %p117
        %p361 = pneg %p148
        %p362 = pneg %p145
        %s363 = sand.u32 %s135, 1
        %s364 = scalar_lea.sflag [#allocation4], %s363
        %s365 = sand.u32 %s135, 1
        %s366 = smul.addr %s365, 8
        %s367 = scalar_lea.vmem [#allocation8], %s366
        %p368 = pneg %p176
        %p369 = pneg %p173
        %s370 = sand.u32 %s33, 1
        %s371 = scalar_lea.sflag [#allocation10], %s370
        %s372 = sand.u32 %s163, 1
        %s373 = smul.addr %s372, 8
        %s374 = scalar_lea.vmem [#allocation9], %s373
        %p375 = pneg %p204
        %p376 = pneg %p201
        %s377 = sand.u32 %s33, 1
        %s378 = scalar_lea.sflag [#allocation10], %s377
        %s379 = sand.u32 %s191, 1
        %s380 = smul.addr %s379, 8
        %s381 = scalar_lea.vmem [#allocation11], %s380
        %p382 = pneg %p232
        %p383 = pneg %p229
        %s384 = sand.u32 %s219, 1
        %s385 = scalar_lea.sflag [#allocation13], %s384
        %s386 = sand.u32 %s219, 1
        %s387 = smul.addr %s386, 8
        %s388 = scalar_lea.vmem [#allocation12], %s387
        %v390 = vld [vmem:[%s317] sm:$0xf]
        %v391 = vld [vmem:[%s326] sm:$0xf]
        %v392 = vld [vmem:[%s335] sm:$0xf]
        %v393 = vlaneseq
        %v394 = vand.u32 %v393, 127
        %vm395 = vcmp.lt.s32.totalorder %v394, 0
        %v396 = vsub.s32 0, %v394
        %v397 = vsel %vm395, %v396, %v394
        %v398 = vshrl.u32 %v397, 4
        %v399 = vand.u32 %v397, 15
        %v400 = vsub.s32 0, %v399
        %v401 = vsel %vm395, %v400, %v399
        %vm402 = vcmp.ne.s32.totalorder %v401, 0
        %vm403 = vcmp.lt.s32.totalorder %v401, 0
        %vm404 = vmand %vm403, %vm402
        %v405 = vadd.s32 %v401, 16
        %v406 = vsel %vm404, %v405, %v401
        %vm407 = vcmp.lt.s32.totalorder %v406, 8
        %v408 = vsel %vm407, 0.35355338, -0.35355338
        %v409 = vunpack.c.l.bf16 %v391
        %v410 = vmul.f32 %v409, %v408
        %v411 = vpack.c.bf16 %v410, %v410
        %vm412 = vcmask 130048
        %v414 = vsel %vm412, %v390, 0
        %v417 = vsel %vm412, %v411, 0
        %419 = vmatprep.subr.bf16.mxu0 0
        %420 = vmatpush1.bf16.xpose.msra.mxu0 %v417
        %421 = vmatprep.subr.bf16.mxu0 0
        %422 = vmatpush1.bf16.xpose.msra.mxu0 0
        %423 = vmatprep.subr.bf16.mxu0 0
        %424 = vmatpush1.bf16.xpose.msra.mxu0 0
        %425 = vmatprep.subr.bf16.mxu0 0
        %426 = vmatpush1.bf16.xpose.msra.mxu0 0
        %427 = vmatprep.subr.bf16.mxu0 0
        %428 = vmatpush1.bf16.xpose.msra.mxu0 0
        %429 = vmatprep.subr.bf16.mxu0 0
        %430 = vmatpush1.bf16.xpose.msra.mxu0 0
        %431 = vmatprep.subr.bf16.mxu0 0
        %432 = vmatpush1.bf16.xpose.msra.mxu0 0
        %433 = vmatprep.subr.bf16.mxu0 0
        %434 = vmatpush1.bf16.xpose.msra.mxu0 0
        %435 = vmatprep.subr.bf16.mxu0 0
        %436 = vmatpush1.bf16.xpose.msra.mxu0 0
        %437 = vmatprep.subr.bf16.mxu0 0
        %438 = vmatpush1.bf16.xpose.msra.mxu0 0
        %439 = vmatprep.subr.bf16.mxu0 0
        %440 = vmatpush1.bf16.xpose.msra.mxu0 0
        %441 = vmatprep.subr.bf16.mxu0 0
        %442 = vmatpush1.bf16.xpose.msra.mxu0 0
        %443 = vmatprep.subr.bf16.mxu0 0
        %444 = vmatpush1.bf16.xpose.msra.mxu0 0
        %445 = vmatprep.subr.bf16.mxu0 0
        %446 = vmatpush1.bf16.xpose.msra.mxu0 0
        %447 = vmatprep.subr.bf16.mxu0 0
        %448 = vmatpush1.bf16.xpose.msra.mxu0 0
        %449 = vmatprep.subr.bf16.mxu0 0
        %450 = vmatpush1.bf16.xpose.msra.mxu0 0
        %451 = vmatprep.mubr.bf16.mxu0 0
        %452 = vmatmul.mubr.bf16.gmra.mrb[0].mxu0 %v414
        %v453 = vpop.f32.mrb[0].mxu0
        %v454 = vadd.f32 0.0, %v453
        %v455 = vpop.f32.mrb[0].mxu0
        %v456 = vpop.f32.mrb[0].mxu0
        %v457 = vpop.f32.mrb[0].mxu0
        %458 = vdwg.mxu0
        %v460 = vsel %vm412, %v392, 0
        %462 = vmatprep.subr.bf16.mxu0 0
        %463 = vmatpush1.bf16.xpose.msra.mxu0 %v460
        %464 = vmatprep.subr.bf16.mxu0 0
        %465 = vmatpush1.bf16.xpose.msra.mxu0 0
        %466 = vmatprep.subr.bf16.mxu0 0
        %467 = vmatpush1.bf16.xpose.msra.mxu0 0
        %468 = vmatprep.subr.bf16.mxu0 0
        %469 = vmatpush1.bf16.xpose.msra.mxu0 0
        %470 = vmatprep.subr.bf16.mxu0 0
        %471 = vmatpush1.bf16.xpose.msra.mxu0 0
        %472 = vmatprep.subr.bf16.mxu0 0
        %473 = vmatpush1.bf16.xpose.msra.mxu0 0
        %474 = vmatprep.subr.bf16.mxu0 0
        %475 = vmatpush1.bf16.xpose.msra.mxu0 0
        %476 = vmatprep.subr.bf16.mxu0 0
        %477 = vmatpush1.bf16.xpose.msra.mxu0 0
        %478 = vmatprep.subr.bf16.mxu0 0
        %479 = vmatpush1.bf16.xpose.msra.mxu0 0
        %480 = vmatprep.subr.bf16.mxu0 0
        %481 = vmatpush1.bf16.xpose.msra.mxu0 0
        %482 = vmatprep.subr.bf16.mxu0 0
        %483 = vmatpush1.bf16.xpose.msra.mxu0 0
        %484 = vmatprep.subr.bf16.mxu0 0
        %485 = vmatpush1.bf16.xpose.msra.mxu0 0
        %486 = vmatprep.subr.bf16.mxu0 0
        %487 = vmatpush1.bf16.xpose.msra.mxu0 0
        %488 = vmatprep.subr.bf16.mxu0 0
        %489 = vmatpush1.bf16.xpose.msra.mxu0 0
        %490 = vmatprep.subr.bf16.mxu0 0
        %491 = vmatpush1.bf16.xpose.msra.mxu0 0
        %492 = vmatprep.subr.bf16.mxu0 0
        %493 = vmatpush1.bf16.xpose.msra.mxu0 0
        %494 = vmatprep.mubr.bf16.mxu0 0
        %495 = vmatmul.mubr.bf16.gmra.mrb[0].mxu0 %v414
        %v496 = vpop.f32.mrb[0].mxu0
        %v497 = vadd.f32 0.0, %v496
        %v498 = vpop.f32.mrb[0].mxu0
        %v499 = vpop.f32.mrb[0].mxu0
        %v500 = vpop.f32.mrb[0].mxu0
        %501 = vdwg.mxu0
        %vm502 = vcmask 64512
        %v503 = vsel %vm502, %v454, -inf
        %504 = vmax.xlane.f32.xlu0 %v503
        %v505 = vpop.xlane.xlu0 %504
        %v506 = vsub.f32 %v454, %v505
        %v507 = vmul.f32 %v506, 1.442695
        %v508 = vpow.pop %v507
        %v509 = vsel %vm502, %v508, 0.0
        %510 = vadd.xlane.f32.xlu0 %v509
        %v511 = vpop.xlane.xlu0 %510
        %v512 = vrcp.pop %v511
        %v513 = vmul.f32 %v508, %v512
        %v514 = vsel %vm502, %v497, -inf
        %515 = vmax.xlane.f32.xlu0 %v514
        %v516 = vpop.xlane.xlu0 %515
        %v517 = vsub.f32 %v497, %v516
        %v518 = vmul.f32 %v517, 1.442695
        %v519 = vpow.pop %v518
        %v520 = vsel %vm502, %v519, 0.0
        %521 = vadd.xlane.f32.xlu0 %v520
        %v522 = vpop.xlane.xlu0 %521
        %v523 = vrcp.pop %v522
        %v524 = vmul.f32 %v519, %v523
        %525 = vst.msk [vmem:[%s381] sm:$0xff] %vm502, %v513
        %526 = vst.msk [vmem:[%s388] sm:$0xff] %vm502, %v524
        %v527 = vpack.c.bf16 %v513, %v513
        %v529 = vsel %vm502, %v527, 0
        %vm531 = vcmask 1043456
        %v533 = vsel %vm531, %v391, 0
        %535 = vmatprep.subr.bf16.mxu0 0
        %536 = vmatpush1.bf16.msra.mxu0 %v533
        %537 = vmatprep.subr.bf16.mxu0 0
        %538 = vmatpush1.bf16.msra.mxu0 0
        %539 = vmatprep.subr.bf16.mxu0 0
        %540 = vmatpush1.bf16.msra.mxu0 0
        %541 = vmatprep.subr.bf16.mxu0 0
        %542 = vmatpush1.bf16.msra.mxu0 0
        %543 = vmatprep.subr.bf16.mxu0 0
        %544 = vmatpush1.bf16.msra.mxu0 0
        %545 = vmatprep.subr.bf16.mxu0 0
        %546 = vmatpush1.bf16.msra.mxu0 0
        %547 = vmatprep.subr.bf16.mxu0 0
        %548 = vmatpush1.bf16.msra.mxu0 0
        %549 = vmatprep.subr.bf16.mxu0 0
        %550 = vmatpush1.bf16.msra.mxu0 0
        %551 = vmatprep.subr.bf16.mxu0 0
        %552 = vmatpush1.bf16.msra.mxu0 0
        %553 = vmatprep.subr.bf16.mxu0 0
        %554 = vmatpush1.bf16.msra.mxu0 0
        %555 = vmatprep.subr.bf16.mxu0 0
        %556 = vmatpush1.bf16.msra.mxu0 0
        %557 = vmatprep.subr.bf16.mxu0 0
        %558 = vmatpush1.bf16.msra.mxu0 0
        %559 = vmatprep.subr.bf16.mxu0 0
        %560 = vmatpush1.bf16.msra.mxu0 0
        %561 = vmatprep.subr.bf16.mxu0 0
        %562 = vmatpush1.bf16.msra.mxu0 0
        %563 = vmatprep.subr.bf16.mxu0 0
        %564 = vmatpush1.bf16.msra.mxu0 0
        %565 = vmatprep.subr.bf16.mxu0 0
        %566 = vmatpush1.bf16.msra.mxu0 0
        %567 = vmatprep.mubr.bf16.mxu0 0
        %568 = vmatmul.mubr.bf16.gmra.mrb[0].mxu0 %v529
        %v569 = vpop.f32.mrb[0].mxu0
        %v570 = vadd.f32 0.0, %v569
        %v571 = vpop.f32.mrb[0].mxu0
        %v572 = vpop.f32.mrb[0].mxu0
        %v573 = vpop.f32.mrb[0].mxu0
        %574 = vdwg.mxu0
        %v575 = vpack.c.bf16 %v524, %v524
        %v577 = vsel %vm502, %v575, 0
        %579 = vmatprep.subr.bf16.mxu0 0
        %580 = vmatpush1.bf16.msra.mxu0 %v533
        %581 = vmatprep.subr.bf16.mxu0 0
        %582 = vmatpush1.bf16.msra.mxu0 0
        %583 = vmatprep.subr.bf16.mxu0 0
        %584 = vmatpush1.bf16.msra.mxu0 0
        %585 = vmatprep.subr.bf16.mxu0 0
        %586 = vmatpush1.bf16.msra.mxu0 0
        %587 = vmatprep.subr.bf16.mxu0 0
        %588 = vmatpush1.bf16.msra.mxu0 0
        %589 = vmatprep.subr.bf16.mxu0 0
        %590 = vmatpush1.bf16.msra.mxu0 0
        %591 = vmatprep.subr.bf16.mxu0 0
        %592 = vmatpush1.bf16.msra.mxu0 0
        %593 = vmatprep.subr.bf16.mxu0 0
        %594 = vmatpush1.bf16.msra.mxu0 0
        %595 = vmatprep.subr.bf16.mxu0 0
        %596 = vmatpush1.bf16.msra.mxu0 0
        %597 = vmatprep.subr.bf16.mxu0 0
        %598 = vmatpush1.bf16.msra.mxu0 0
        %599 = vmatprep.subr.bf16.mxu0 0
        %600 = vmatpush1.bf16.msra.mxu0 0
        %601 = vmatprep.subr.bf16.mxu0 0
        %602 = vmatpush1.bf16.msra.mxu0 0
        %603 = vmatprep.subr.bf16.mxu0 0
        %604 = vmatpush1.bf16.msra.mxu0 0
        %605 = vmatprep.subr.bf16.mxu0 0
        %606 = vmatpush1.bf16.msra.mxu0 0
        %607 = vmatprep.subr.bf16.mxu0 0
        %608 = vmatpush1.bf16.msra.mxu0 0
        %609 = vmatprep.subr.bf16.mxu0 0
        %610 = vmatpush1.bf16.msra.mxu0 0
        %611 = vmatprep.mubr.bf16.mxu0 0
        %612 = vmatmul.mubr.bf16.gmra.mrb[0].mxu0 %v577
        %v613 = vpop.f32.mrb[0].mxu0
        %v614 = vadd.f32 0.0, %v613
        %v615 = vpop.f32.mrb[0].mxu0
        %v616 = vpop.f32.mrb[0].mxu0
        %v617 = vpop.f32.mrb[0].mxu0
        %618 = vdwg.mxu0
        %620 = vrot.lane.b32.xlu0 %v614, 120
        %v621 = vpop.permute.xlu0 %620
        %v623 = vsub.f32 %v570, %v621
        %624 = vrot.lane.b32.xlu0 %v614, 8
        %v625 = vpop.permute.xlu0 %624
        %v627 = vadd.f32 %v570, %v625
        %v629 = vunpack.c.l.b16 %v390
        %v630 = vpack.c.b16 %v629, %v629
        %631 = vrot.lane.b32.xlu0 %v630, 112
        %v632 = vpop.permute.xlu0 %631
        %634 = vrot.lane.b32.xlu0 %v411, 112
        %v635 = vpop.permute.xlu0 %634
        %v637 = vsel %vm412, %v632, 0
        %v640 = vsel %vm412, %v635, 0
        %642 = vmatprep.subr.bf16.mxu0 0
        %643 = vmatpush1.bf16.xpose.msra.mxu0 %v640
        %644 = vmatprep.subr.bf16.mxu0 0
        %645 = vmatpush1.bf16.xpose.msra.mxu0 0
        %646 = vmatprep.subr.bf16.mxu0 0
        %647 = vmatpush1.bf16.xpose.msra.mxu0 0
        %648 = vmatprep.subr.bf16.mxu0 0
        %649 = vmatpush1.bf16.xpose.msra.mxu0 0
        %650 = vmatprep.subr.bf16.mxu0 0
        %651 = vmatpush1.bf16.xpose.msra.mxu0 0
        %652 = vmatprep.subr.bf16.mxu0 0
        %653 = vmatpush1.bf16.xpose.msra.mxu0 0
        %654 = vmatprep.subr.bf16.mxu0 0
        %655 = vmatpush1.bf16.xpose.msra.mxu0 0
        %656 = vmatprep.subr.bf16.mxu0 0
        %657 = vmatpush1.bf16.xpose.msra.mxu0 0
        %658 = vmatprep.subr.bf16.mxu0 0
        %659 = vmatpush1.bf16.xpose.msra.mxu0 0
        %660 = vmatprep.subr.bf16.mxu0 0
        %661 = vmatpush1.bf16.xpose.msra.mxu0 0
        %662 = vmatprep.subr.bf16.mxu0 0
        %663 = vmatpush1.bf16.xpose.msra.mxu0 0
        %664 = vmatprep.subr.bf16.mxu0 0
        %665 = vmatpush1.bf16.xpose.msra.mxu0 0
        %666 = vmatprep.subr.bf16.mxu0 0
        %667 = vmatpush1.bf16.xpose.msra.mxu0 0
        %668 = vmatprep.subr.bf16.mxu0 0
        %669 = vmatpush1.bf16.xpose.msra.mxu0 0
        %670 = vmatprep.subr.bf16.mxu0 0
        %671 = vmatpush1.bf16.xpose.msra.mxu0 0
        %672 = vmatprep.subr.bf16.mxu0 0
        %673 = vmatpush1.bf16.xpose.msra.mxu0 0
        %674 = vmatprep.mubr.bf16.mxu0 0
        %675 = vmatmul.mubr.bf16.gmra.mrb[0].mxu0 %v637
        %v676 = vpop.f32.mrb[0].mxu0
        %v677 = vadd.f32 0.0, %v676
        %v678 = vpop.f32.mrb[0].mxu0
        %v679 = vpop.f32.mrb[0].mxu0
        %v680 = vpop.f32.mrb[0].mxu0
        %681 = vdwg.mxu0
        %v683 = vunpack.c.l.b16 %v392
        %v684 = vpack.c.b16 %v683, %v683
        %685 = vrot.lane.b32.xlu0 %v684, 112
        %v686 = vpop.permute.xlu0 %685
        %v688 = vsel %vm412, %v686, 0
        %690 = vmatprep.subr.bf16.mxu0 0
        %691 = vmatpush1.bf16.xpose.msra.mxu0 %v688
        %692 = vmatprep.subr.bf16.mxu0 0
        %693 = vmatpush1.bf16.xpose.msra.mxu0 0
        %694 = vmatprep.subr.bf16.mxu0 0
        %695 = vmatpush1.bf16.xpose.msra.mxu0 0
        %696 = vmatprep.subr.bf16.mxu0 0
        %697 = vmatpush1.bf16.xpose.msra.mxu0 0
        %698 = vmatprep.subr.bf16.mxu0 0
        %699 = vmatpush1.bf16.xpose.msra.mxu0 0
        %700 = vmatprep.subr.bf16.mxu0 0
        %701 = vmatpush1.bf16.xpose.msra.mxu0 0
        %702 = vmatprep.subr.bf16.mxu0 0
        %703 = vmatpush1.bf16.xpose.msra.mxu0 0
        %704 = vmatprep.subr.bf16.mxu0 0
        %705 = vmatpush1.bf16.xpose.msra.mxu0 0
        %706 = vmatprep.subr.bf16.mxu0 0
        %707 = vmatpush1.bf16.xpose.msra.mxu0 0
        %708 = vmatprep.subr.bf16.mxu0 0
        %709 = vmatpush1.bf16.xpose.msra.mxu0 0
        %710 = vmatprep.subr.bf16.mxu0 0
        %711 = vmatpush1.bf16.xpose.msra.mxu0 0
        %712 = vmatprep.subr.bf16.mxu0 0
        %713 = vmatpush1.bf16.xpose.msra.mxu0 0
        %714 = vmatprep.subr.bf16.mxu0 0
        %715 = vmatpush1.bf16.xpose.msra.mxu0 0
        %716 = vmatprep.subr.bf16.mxu0 0
        %717 = vmatpush1.bf16.xpose.msra.mxu0 0
        %718 = vmatprep.subr.bf16.mxu0 0
        %719 = vmatpush1.bf16.xpose.msra.mxu0 0
        %720 = vmatprep.subr.bf16.mxu0 0
        %721 = vmatpush1.bf16.xpose.msra.mxu0 0
        %722 = vmatprep.mubr.bf16.mxu0 0
        %723 = vmatmul.mubr.bf16.gmra.mrb[0].mxu0 %v637
        %v724 = vpop.f32.mrb[0].mxu0
        %v725 = vadd.f32 0.0, %v724
        %v726 = vpop.f32.mrb[0].mxu0
        %v727 = vpop.f32.mrb[0].mxu0
        %v728 = vpop.f32.mrb[0].mxu0
        %729 = vdwg.mxu0
        %v730 = vsel %vm502, %v677, -inf
        %731 = vmax.xlane.f32.xlu0 %v730
        %v732 = vpop.xlane.xlu0 %731
        %v733 = vsub.f32 %v677, %v732
        %v734 = vmul.f32 %v733, 1.442695
        %v735 = vpow.pop %v734
        %v736 = vsel %vm502, %v735, 0.0
        %737 = vadd.xlane.f32.xlu0 %v736
        %v738 = vpop.xlane.xlu0 %737
        %v739 = vrcp.pop %v738
        %v740 = vmul.f32 %v735, %v739
        %v741 = vsel %vm502, %v725, -inf
        %742 = vmax.xlane.f32.xlu0 %v741
        %v743 = vpop.xlane.xlu0 %742
        %v744 = vsub.f32 %v725, %v743
        %v745 = vmul.f32 %v744, 1.442695
        %v746 = vpow.pop %v745
        %v747 = vsel %vm502, %v746, 0.0
        %748 = vadd.xlane.f32.xlu0 %v747
        %v749 = vpop.xlane.xlu0 %748
        %v750 = vrcp.pop %v749
        %v751 = vmul.f32 %v746, %v750
        %v752 = vld [vmem:[%s381] sm:$0xff]
        %v753 = vadd.f32 %v752, %v740
        %754 = vst.msk [vmem:[%s381] sm:$0xff] %vm502, %v753
        %v755 = vld [vmem:[%s388] sm:$0xff]
        %v756 = vadd.f32 %v755, %v751
        %757 = vst.msk [vmem:[%s388] sm:$0xff] %vm502, %v756
        %v758 = vpack.c.bf16 %v740, %v740
        %v760 = vunpack.c.l.b16 %v391
        %v761 = vpack.c.b16 %v760, %v760
        %762 = vrot.lane.b32.xlu0 %v761, 112
        %v763 = vpop.permute.xlu0 %762
        %v765 = vsel %vm502, %v758, 0
        %v768 = vsel %vm531, %v763, 0
        %770 = vmatprep.subr.bf16.mxu0 0
        %771 = vmatpush1.bf16.msra.mxu0 %v768
        %772 = vmatprep.subr.bf16.mxu0 0
        %773 = vmatpush1.bf16.msra.mxu0 0
        %774 = vmatprep.subr.bf16.mxu0 0
        %775 = vmatpush1.bf16.msra.mxu0 0
        %776 = vmatprep.subr.bf16.mxu0 0
        %777 = vmatpush1.bf16.msra.mxu0 0
        %778 = vmatprep.subr.bf16.mxu0 0
        %779 = vmatpush1.bf16.msra.mxu0 0
        %780 = vmatprep.subr.bf16.mxu0 0
        %781 = vmatpush1.bf16.msra.mxu0 0
        %782 = vmatprep.subr.bf16.mxu0 0
        %783 = vmatpush1.bf16.msra.mxu0 0
        %784 = vmatprep.subr.bf16.mxu0 0
        %785 = vmatpush1.bf16.msra.mxu0 0
        %786 = vmatprep.subr.bf16.mxu0 0
        %787 = vmatpush1.bf16.msra.mxu0 0
        %788 = vmatprep.subr.bf16.mxu0 0
        %789 = vmatpush1.bf16.msra.mxu0 0
        %790 = vmatprep.subr.bf16.mxu0 0
        %791 = vmatpush1.bf16.msra.mxu0 0
        %792 = vmatprep.subr.bf16.mxu0 0
        %793 = vmatpush1.bf16.msra.mxu0 0
        %794 = vmatprep.subr.bf16.mxu0 0
        %795 = vmatpush1.bf16.msra.mxu0 0
        %796 = vmatprep.subr.bf16.mxu0 0
        %797 = vmatpush1.bf16.msra.mxu0 0
        %798 = vmatprep.subr.bf16.mxu0 0
        %799 = vmatpush1.bf16.msra.mxu0 0
        %800 = vmatprep.subr.bf16.mxu0 0
        %801 = vmatpush1.bf16.msra.mxu0 0
        %802 = vmatprep.mubr.bf16.mxu0 0
        %803 = vmatmul.mubr.bf16.gmra.mrb[0].mxu0 %v765
        %v804 = vpop.f32.mrb[0].mxu0
        %v805 = vadd.f32 0.0, %v804
        %v806 = vpop.f32.mrb[0].mxu0
        %v807 = vpop.f32.mrb[0].mxu0
        %v808 = vpop.f32.mrb[0].mxu0
        %809 = vdwg.mxu0
        %v810 = vpack.c.bf16 %v751, %v751
        %v812 = vsel %vm502, %v810, 0
        %814 = vmatprep.subr.bf16.mxu0 0
        %815 = vmatpush1.bf16.msra.mxu0 %v768
        %816 = vmatprep.subr.bf16.mxu0 0
        %817 = vmatpush1.bf16.msra.mxu0 0
        %818 = vmatprep.subr.bf16.mxu0 0
        %819 = vmatpush1.bf16.msra.mxu0 0
        %820 = vmatprep.subr.bf16.mxu0 0
        %821 = vmatpush1.bf16.msra.mxu0 0
        %822 = vmatprep.subr.bf16.mxu0 0
        %823 = vmatpush1.bf16.msra.mxu0 0
        %824 = vmatprep.subr.bf16.mxu0 0
        %825 = vmatpush1.bf16.msra.mxu0 0
        %826 = vmatprep.subr.bf16.mxu0 0
        %827 = vmatpush1.bf16.msra.mxu0 0
        %828 = vmatprep.subr.bf16.mxu0 0
        %829 = vmatpush1.bf16.msra.mxu0 0
        %830 = vmatprep.subr.bf16.mxu0 0
        %831 = vmatpush1.bf16.msra.mxu0 0
        %832 = vmatprep.subr.bf16.mxu0 0
        %833 = vmatpush1.bf16.msra.mxu0 0
        %834 = vmatprep.subr.bf16.mxu0 0
        %835 = vmatpush1.bf16.msra.mxu0 0
        %836 = vmatprep.subr.bf16.mxu0 0
        %837 = vmatpush1.bf16.msra.mxu0 0
        %838 = vmatprep.subr.bf16.mxu0 0
        %839 = vmatpush1.bf16.msra.mxu0 0
        %840 = vmatprep.subr.bf16.mxu0 0
        %841 = vmatpush1.bf16.msra.mxu0 0
        %842 = vmatprep.subr.bf16.mxu0 0
        %843 = vmatpush1.bf16.msra.mxu0 0
        %844 = vmatprep.subr.bf16.mxu0 0
        %845 = vmatpush1.bf16.msra.mxu0 0
        %846 = vmatprep.mubr.bf16.mxu0 0
        %847 = vmatmul.mubr.bf16.gmra.mrb[0].mxu0 %v812
        %v848 = vpop.f32.mrb[0].mxu0
        %v849 = vadd.f32 0.0, %v848
        %v850 = vpop.f32.mrb[0].mxu0
        %v851 = vpop.f32.mrb[0].mxu0
        %v852 = vpop.f32.mrb[0].mxu0
        %853 = vdwg.mxu0
        %855 = vrot.lane.b32.xlu0 %v849, 120
        %v856 = vpop.permute.xlu0 %855
        %v858 = vsub.f32 %v805, %v856
        %859 = vrot.lane.b32.xlu0 %v849, 8
        %v860 = vpop.permute.xlu0 %859
        %v862 = vadd.f32 %v805, %v860
        %863 = vrot.lane.b32.xlu0 %v630, 96
        %v864 = vpop.permute.xlu0 %863
        %865 = vrot.lane.b32.xlu0 %v411, 96
        %v866 = vpop.permute.xlu0 %865
        %v868 = vsel %vm412, %v864, 0
        %v871 = vsel %vm412, %v866, 0
        %873 = vmatprep.subr.bf16.mxu0 0
        %874 = vmatpush1.bf16.xpose.msra.mxu0 %v871
        %875 = vmatprep.subr.bf16.mxu0 0
        %876 = vmatpush1.bf16.xpose.msra.mxu0 0
        %877 = vmatprep.subr.bf16.mxu0 0
        %878 = vmatpush1.bf16.xpose.msra.mxu0 0
        %879 = vmatprep.subr.bf16.mxu0 0
        %880 = vmatpush1.bf16.xpose.msra.mxu0 0
        %881 = vmatprep.subr.bf16.mxu0 0
        %882 = vmatpush1.bf16.xpose.msra.mxu0 0
        %883 = vmatprep.subr.bf16.mxu0 0
        %884 = vmatpush1.bf16.xpose.msra.mxu0 0
        %885 = vmatprep.subr.bf16.mxu0 0
        %886 = vmatpush1.bf16.xpose.msra.mxu0 0
        %887 = vmatprep.subr.bf16.mxu0 0
        %888 = vmatpush1.bf16.xpose.msra.mxu0 0
        %889 = vmatprep.subr.bf16.mxu0 0
        %890 = vmatpush1.bf16.xpose.msra.mxu0 0
        %891 = vmatprep.subr.bf16.mxu0 0
        %892 = vmatpush1.bf16.xpose.msra.mxu0 0
        %893 = vmatprep.subr.bf16.mxu0 0
        %894 = vmatpush1.bf16.xpose.msra.mxu0 0
        %895 = vmatprep.subr.bf16.mxu0 0
        %896 = vmatpush1.bf16.xpose.msra.mxu0 0
        %897 = vmatprep.subr.bf16.mxu0 0
        %898 = vmatpush1.bf16.xpose.msra.mxu0 0
        %899 = vmatprep.subr.bf16.mxu0 0
        %900 = vmatpush1.bf16.xpose.msra.mxu0 0
        %901 = vmatprep.subr.bf16.mxu0 0
        %902 = vmatpush1.bf16.xpose.msra.mxu0 0
        %903 = vmatprep.subr.bf16.mxu0 0
        %904 = vmatpush1.bf16.xpose.msra.mxu0 0
        %905 = vmatprep.mubr.bf16.mxu0 0
        %906 = vmatmul.mubr.bf16.gmra.mrb[0].mxu0 %v868
        %v907 = vpop.f32.mrb[0].mxu0
        %v908 = vadd.f32 0.0, %v907
        %v909 = vpop.f32.mrb[0].mxu0
        %v910 = vpop.f32.mrb[0].mxu0
        %v911 = vpop.f32.mrb[0].mxu0
        %912 = vdwg.mxu0
        %913 = vrot.lane.b32.xlu0 %v684, 96
        %v914 = vpop.permute.xlu0 %913
        %v916 = vsel %vm412, %v914, 0
        %918 = vmatprep.subr.bf16.mxu0 0
        %919 = vmatpush1.bf16.xpose.msra.mxu0 %v916
        %920 = vmatprep.subr.bf16.mxu0 0
        %921 = vmatpush1.bf16.xpose.msra.mxu0 0
        %922 = vmatprep.subr.bf16.mxu0 0
        %923 = vmatpush1.bf16.xpose.msra.mxu0 0
        %924 = vmatprep.subr.bf16.mxu0 0
        %925 = vmatpush1.bf16.xpose.msra.mxu0 0
        %926 = vmatprep.subr.bf16.mxu0 0
        %927 = vmatpush1.bf16.xpose.msra.mxu0 0
        %928 = vmatprep.subr.bf16.mxu0 0
        %929 = vmatpush1.bf16.xpose.msra.mxu0 0
        %930 = vmatprep.subr.bf16.mxu0 0
        %931 = vmatpush1.bf16.xpose.msra.mxu0 0
        %932 = vmatprep.subr.bf16.mxu0 0
        %933 = vmatpush1.bf16.xpose.msra.mxu0 0
        %934 = vmatprep.subr.bf16.mxu0 0
        %935 = vmatpush1.bf16.xpose.msra.mxu0 0
        %936 = vmatprep.subr.bf16.mxu0 0
        %937 = vmatpush1.bf16.xpose.msra.mxu0 0
        %938 = vmatprep.subr.bf16.mxu0 0
        %939 = vmatpush1.bf16.xpose.msra.mxu0 0
        %940 = vmatprep.subr.bf16.mxu0 0
        %941 = vmatpush1.bf16.xpose.msra.mxu0 0
        %942 = vmatprep.subr.bf16.mxu0 0
        %943 = vmatpush1.bf16.xpose.msra.mxu0 0
        %944 = vmatprep.subr.bf16.mxu0 0
        %945 = vmatpush1.bf16.xpose.msra.mxu0 0
        %946 = vmatprep.subr.bf16.mxu0 0
        %947 = vmatpush1.bf16.xpose.msra.mxu0 0
        %948 = vmatprep.subr.bf16.mxu0 0
        %949 = vmatpush1.bf16.xpose.msra.mxu0 0
        %950 = vmatprep.mubr.bf16.mxu0 0
        %951 = vmatmul.mubr.bf16.gmra.mrb[0].mxu0 %v868
        %v952 = vpop.f32.mrb[0].mxu0
        %v953 = vadd.f32 0.0, %v952
        %v954 = vpop.f32.mrb[0].mxu0
        %v955 = vpop.f32.mrb[0].mxu0
        %v956 = vpop.f32.mrb[0].mxu0
        %957 = vdwg.mxu0
        %v958 = vsel %vm502, %v908, -inf
        %959 = vmax.xlane.f32.xlu0 %v958
        %v960 = vpop.xlane.xlu0 %959
        %v961 = vsub.f32 %v908, %v960
        %v962 = vmul.f32 %v961, 1.442695
        %v963 = vpow.pop %v962
        %v964 = vsel %vm502, %v963, 0.0
        %965 = vadd.xlane.f32.xlu0 %v964
        %v966 = vpop.xlane.xlu0 %965
        %v967 = vrcp.pop %v966
        %v968 = vmul.f32 %v963, %v967
        %v969 = vsel %vm502, %v953, -inf
        %970 = vmax.xlane.f32.xlu0 %v969
        %v971 = vpop.xlane.xlu0 %970
        %v972 = vsub.f32 %v953, %v971
        %v973 = vmul.f32 %v972, 1.442695
        %v974 = vpow.pop %v973
        %v975 = vsel %vm502, %v974, 0.0
        %976 = vadd.xlane.f32.xlu0 %v975
        %v977 = vpop.xlane.xlu0 %976
        %v978 = vrcp.pop %v977
        %v979 = vmul.f32 %v974, %v978
        %v980 = vld [vmem:[%s381] sm:$0xff]
        %v981 = vadd.f32 %v980, %v968
        %982 = vst.msk [vmem:[%s381] sm:$0xff] %vm502, %v981
        %v983 = vld [vmem:[%s388] sm:$0xff]
        %v984 = vadd.f32 %v983, %v979
        %985 = vst.msk [vmem:[%s388] sm:$0xff] %vm502, %v984
        %v986 = vpack.c.bf16 %v968, %v968
        %987 = vrot.lane.b32.xlu0 %v761, 96
        %v988 = vpop.permute.xlu0 %987
        %v990 = vsel %vm502, %v986, 0
        %v993 = vsel %vm531, %v988, 0
        %995 = vmatprep.subr.bf16.mxu0 0
        %996 = vmatpush1.bf16.msra.mxu0 %v993
        %997 = vmatprep.subr.bf16.mxu0 0
        %998 = vmatpush1.bf16.msra.mxu0 0
        %999 = vmatprep.subr.bf16.mxu0 0
        %1000 = vmatpush1.bf16.msra.mxu0 0
        %1001 = vmatprep.subr.bf16.mxu0 0
        %1002 = vmatpush1.bf16.msra.mxu0 0
        %1003 = vmatprep.subr.bf16.mxu0 0
        %1004 = vmatpush1.bf16.msra.mxu0 0
        %1005 = vmatprep.subr.bf16.mxu0 0
        %1006 = vmatpush1.bf16.msra.mxu0 0
        %1007 = vmatprep.subr.bf16.mxu0 0
        %1008 = vmatpush1.bf16.msra.mxu0 0
        %1009 = vmatprep.subr.bf16.mxu0 0
        %1010 = vmatpush1.bf16.msra.mxu0 0
        %1011 = vmatprep.subr.bf16.mxu0 0
        %1012 = vmatpush1.bf16.msra.mxu0 0
        %1013 = vmatprep.subr.bf16.mxu0 0
        %1014 = vmatpush1.bf16.msra.mxu0 0
        %1015 = vmatprep.subr.bf16.mxu0 0
        %1016 = vmatpush1.bf16.msra.mxu0 0
        %1017 = vmatprep.subr.bf16.mxu0 0
        %1018 = vmatpush1.bf16.msra.mxu0 0
        %1019 = vmatprep.subr.bf16.mxu0 0
        %1020 = vmatpush1.bf16.msra.mxu0 0
        %1021 = vmatprep.subr.bf16.mxu0 0
        %1022 = vmatpush1.bf16.msra.mxu0 0
        %1023 = vmatprep.subr.bf16.mxu0 0
        %1024 = vmatpush1.bf16.msra.mxu0 0
        %1025 = vmatprep.subr.bf16.mxu0 0
        %1026 = vmatpush1.bf16.msra.mxu0 0
        %1027 = vmatprep.mubr.bf16.mxu0 0
        %1028 = vmatmul.mubr.bf16.gmra.mrb[0].mxu0 %v990
        %v1029 = vpop.f32.mrb[0].mxu0
        %v1030 = vadd.f32 0.0, %v1029
        %v1031 = vpop.f32.mrb[0].mxu0
        %v1032 = vpop.f32.mrb[0].mxu0
        %v1033 = vpop.f32.mrb[0].mxu0
        %1034 = vdwg.mxu0
        %v1035 = vpack.c.bf16 %v979, %v979
        %v1037 = vsel %vm502, %v1035, 0
        %1039 = vmatprep.subr.bf16.mxu0 0
        %1040 = vmatpush1.bf16.msra.mxu0 %v993
        %1041 = vmatprep.subr.bf16.mxu0 0
        %1042 = vmatpush1.bf16.msra.mxu0 0
        %1043 = vmatprep.subr.bf16.mxu0 0
        %1044 = vmatpush1.bf16.msra.mxu0 0
        %1045 = vmatprep.subr.bf16.mxu0 0
        %1046 = vmatpush1.bf16.msra.mxu0 0
        %1047 = vmatprep.subr.bf16.mxu0 0
        %1048 = vmatpush1.bf16.msra.mxu0 0
        %1049 = vmatprep.subr.bf16.mxu0 0
        %1050 = vmatpush1.bf16.msra.mxu0 0
        %1051 = vmatprep.subr.bf16.mxu0 0
        %1052 = vmatpush1.bf16.msra.mxu0 0
        %1053 = vmatprep.subr.bf16.mxu0 0
        %1054 = vmatpush1.bf16.msra.mxu0 0
        %1055 = vmatprep.subr.bf16.mxu0 0
        %1056 = vmatpush1.bf16.msra.mxu0 0
        %1057 = vmatprep.subr.bf16.mxu0 0
        %1058 = vmatpush1.bf16.msra.mxu0 0
        %1059 = vmatprep.subr.bf16.mxu0 0
        %1060 = vmatpush1.bf16.msra.mxu0 0
        %1061 = vmatprep.subr.bf16.mxu0 0
        %1062 = vmatpush1.bf16.msra.mxu0 0
        %1063 = vmatprep.subr.bf16.mxu0 0
        %1064 = vmatpush1.bf16.msra.mxu0 0
        %1065 = vmatprep.subr.bf16.mxu0 0
        %1066 = vmatpush1.bf16.msra.mxu0 0
        %1067 = vmatprep.subr.bf16.mxu0 0
        %1068 = vmatpush1.bf16.msra.mxu0 0
        %1069 = vmatprep.subr.bf16.mxu0 0
        %1070 = vmatpush1.bf16.msra.mxu0 0
        %1071 = vmatprep.mubr.bf16.mxu0 0
        %1072 = vmatmul.mubr.bf16.gmra.mrb[0].mxu0 %v1037
        %v1073 = vpop.f32.mrb[0].mxu0
        %v1074 = vadd.f32 0.0, %v1073
        %v1075 = vpop.f32.mrb[0].mxu0
        %v1076 = vpop.f32.mrb[0].mxu0
        %v1077 = vpop.f32.mrb[0].mxu0
        %1078 = vdwg.mxu0
        %1080 = vrot.lane.b32.xlu0 %v1074, 120
        %v1081 = vpop.permute.xlu0 %1080
        %v1083 = vsub.f32 %v1030, %v1081
        %1084 = vrot.lane.b32.xlu0 %v1074, 8
        %v1085 = vpop.permute.xlu0 %1084
        %v1087 = vadd.f32 %v1030, %v1085
        %1088 = vrot.lane.b32.xlu0 %v630, 80
        %v1089 = vpop.permute.xlu0 %1088
        %1090 = vrot.lane.b32.xlu0 %v411, 80
        %v1091 = vpop.permute.xlu0 %1090
        %v1093 = vsel %vm412, %v1089, 0
        %v1096 = vsel %vm412, %v1091, 0
        %1098 = vmatprep.subr.bf16.mxu0 0
        %1099 = vmatpush1.bf16.xpose.msra.mxu0 %v1096
        %1100 = vmatprep.subr.bf16.mxu0 0
        %1101 = vmatpush1.bf16.xpose.msra.mxu0 0
        %1102 = vmatprep.subr.bf16.mxu0 0
        %1103 = vmatpush1.bf16.xpose.msra.mxu0 0
        %1104 = vmatprep.subr.bf16.mxu0 0
        %1105 = vmatpush1.bf16.xpose.msra.mxu0 0
        %1106 = vmatprep.subr.bf16.mxu0 0
        %1107 = vmatpush1.bf16.xpose.msra.mxu0 0
        %1108 = vmatprep.subr.bf16.mxu0 0
        %1109 = vmatpush1.bf16.xpose.msra.mxu0 0
        %1110 = vmatprep.subr.bf16.mxu0 0
        %1111 = vmatpush1.bf16.xpose.msra.mxu0 0
        %1112 = vmatprep.subr.bf16.mxu0 0
        %1113 = vmatpush1.bf16.xpose.msra.mxu0 0
        %1114 = vmatprep.subr.bf16.mxu0 0
        %1115 = vmatpush1.bf16.xpose.msra.mxu0 0
        %1116 = vmatprep.subr.bf16.mxu0 0
        %1117 = vmatpush1.bf16.xpose.msra.mxu0 0
        %1118 = vmatprep.subr.bf16.mxu0 0
        %1119 = vmatpush1.bf16.xpose.msra.mxu0 0
        %1120 = vmatprep.subr.bf16.mxu0 0
        %1121 = vmatpush1.bf16.xpose.msra.mxu0 0
        %1122 = vmatprep.subr.bf16.mxu0 0
        %1123 = vmatpush1.bf16.xpose.msra.mxu0 0
        %1124 = vmatprep.subr.bf16.mxu0 0
        %1125 = vmatpush1.bf16.xpose.msra.mxu0 0
        %1126 = vmatprep.subr.bf16.mxu0 0
        %1127 = vmatpush1.bf16.xpose.msra.mxu0 0
        %1128 = vmatprep.subr.bf16.mxu0 0
        %1129 = vmatpush1.bf16.xpose.msra.mxu0 0
        %1130 = vmatprep.mubr.bf16.mxu0 0
        %1131 = vmatmul.mubr.bf16.gmra.mrb[0].mxu0 %v1093
        %v1132 = vpop.f32.mrb[0].mxu0
        %v1133 = vadd.f32 0.0, %v1132
        %v1134 = vpop.f32.mrb[0].mxu0
        %v1135 = vpop.f32.mrb[0].mxu0
        %v1136 = vpop.f32.mrb[0].mxu0
        %1137 = vdwg.mxu0
        %1138 = vrot.lane.b32.xlu0 %v684, 80
        %v1139 = vpop.permute.xlu0 %1138
        %v1141 = vsel %vm412, %v1139, 0
        %1143 = vmatprep.subr.bf16.mxu0 0
        %1144 = vmatpush1.bf16.xpose.msra.mxu0 %v1141
        %1145 = vmatprep.subr.bf16.mxu0 0
        %1146 = vmatpush1.bf16.xpose.msra.mxu0 0
        %1147 = vmatprep.subr.bf16.mxu0 0
        %1148 = vmatpush1.bf16.xpose.msra.mxu0 0
        %1149 = vmatprep.subr.bf16.mxu0 0
        %1150 = vmatpush1.bf16.xpose.msra.mxu0 0
        %1151 = vmatprep.subr.bf16.mxu0 0
        %1152 = vmatpush1.bf16.xpose.msra.mxu0 0
        %1153 = vmatprep.subr.bf16.mxu0 0
        %1154 = vmatpush1.bf16.xpose.msra.mxu0 0
        %1155 = vmatprep.subr.bf16.mxu0 0
        %1156 = vmatpush1.bf16.xpose.msra.mxu0 0
        %1157 = vmatprep.subr.bf16.mxu0 0
        %1158 = vmatpush1.bf16.xpose.msra.mxu0 0
        %1159 = vmatprep.subr.bf16.mxu0 0
        %1160 = vmatpush1.bf16.xpose.msra.mxu0 0
        %1161 = vmatprep.subr.bf16.mxu0 0
        %1162 = vmatpush1.bf16.xpose.msra.mxu0 0
        %1163 = vmatprep.subr.bf16.mxu0 0
        %1164 = vmatpush1.bf16.xpose.msra.mxu0 0
        %1165 = vmatprep.subr.bf16.mxu0 0
        %1166 = vmatpush1.bf16.xpose.msra.mxu0 0
        %1167 = vmatprep.subr.bf16.mxu0 0
        %1168 = vmatpush1.bf16.xpose.msra.mxu0 0
        %1169 = vmatprep.subr.bf16.mxu0 0
        %1170 = vmatpush1.bf16.xpose.msra.mxu0 0
        %1171 = vmatprep.subr.bf16.mxu0 0
        %1172 = vmatpush1.bf16.xpose.msra.mxu0 0
        %1173 = vmatprep.subr.bf16.mxu0 0
        %1174 = vmatpush1.bf16.xpose.msra.mxu0 0
        %1175 = vmatprep.mubr.bf16.mxu0 0
        %1176 = vmatmul.mubr.bf16.gmra.mrb[0].mxu0 %v1093
        %v1177 = vpop.f32.mrb[0].mxu0
        %v1178 = vadd.f32 0.0, %v1177
        %v1179 = vpop.f32.mrb[0].mxu0
        %v1180 = vpop.f32.mrb[0].mxu0
        %v1181 = vpop.f32.mrb[0].mxu0
        %1182 = vdwg.mxu0
        %v1183 = vsel %vm502, %v1133, -inf
        %1184 = vmax.xlane.f32.xlu0 %v1183
        %v1185 = vpop.xlane.xlu0 %1184
        %v1186 = vsub.f32 %v1133, %v1185
        %v1187 = vmul.f32 %v1186, 1.442695
        %v1188 = vpow.pop %v1187
        %v1189 = vsel %vm502, %v1188, 0.0
        %1190 = vadd.xlane.f32.xlu0 %v1189
        %v1191 = vpop.xlane.xlu0 %1190
        %v1192 = vrcp.pop %v1191
        %v1193 = vmul.f32 %v1188, %v1192
        %v1194 = vsel %vm502, %v1178, -inf
        %1195 = vmax.xlane.f32.xlu0 %v1194
        %v1196 = vpop.xlane.xlu0 %1195
        %v1197 = vsub.f32 %v1178, %v1196
        %v1198 = vmul.f32 %v1197, 1.442695
        %v1199 = vpow.pop %v1198
        %v1200 = vsel %vm502, %v1199, 0.0
        %1201 = vadd.xlane.f32.xlu0 %v1200
        %v1202 = vpop.xlane.xlu0 %1201
        %v1203 = vrcp.pop %v1202
        %v1204 = vmul.f32 %v1199, %v1203
        %v1205 = vld [vmem:[%s381] sm:$0xff]
        %v1206 = vadd.f32 %v1205, %v1193
        %1207 = vst.msk [vmem:[%s381] sm:$0xff] %vm502, %v1206
        %v1208 = vld [vmem:[%s388] sm:$0xff]
        %v1209 = vadd.f32 %v1208, %v1204
        %1210 = vst.msk [vmem:[%s388] sm:$0xff] %vm502, %v1209
        %v1211 = vpack.c.bf16 %v1193, %v1193
        %1212 = vrot.lane.b32.xlu0 %v761, 80
        %v1213 = vpop.permute.xlu0 %1212
        %v1215 = vsel %vm502, %v1211, 0
        %v1218 = vsel %vm531, %v1213, 0
        %1220 = vmatprep.subr.bf16.mxu0 0
        %1221 = vmatpush1.bf16.msra.mxu0 %v1218
        %1222 = vmatprep.subr.bf16.mxu0 0
        %1223 = vmatpush1.bf16.msra.mxu0 0
        %1224 = vmatprep.subr.bf16.mxu0 0
        %1225 = vmatpush1.bf16.msra.mxu0 0
        %1226 = vmatprep.subr.bf16.mxu0 0
        %1227 = vmatpush1.bf16.msra.mxu0 0
        %1228 = vmatprep.subr.bf16.mxu0 0
        %1229 = vmatpush1.bf16.msra.mxu0 0
        %1230 = vmatprep.subr.bf16.mxu0 0
        %1231 = vmatpush1.bf16.msra.mxu0 0
        %1232 = vmatprep.subr.bf16.mxu0 0
        %1233 = vmatpush1.bf16.msra.mxu0 0
        %1234 = vmatprep.subr.bf16.mxu0 0
        %1235 = vmatpush1.bf16.msra.mxu0 0
        %1236 = vmatprep.subr.bf16.mxu0 0
        %1237 = vmatpush1.bf16.msra.mxu0 0
        %1238 = vmatprep.subr.bf16.mxu0 0
        %1239 = vmatpush1.bf16.msra.mxu0 0
        %1240 = vmatprep.subr.bf16.mxu0 0
        %1241 = vmatpush1.bf16.msra.mxu0 0
        %1242 = vmatprep.subr.bf16.mxu0 0
        %1243 = vmatpush1.bf16.msra.mxu0 0
        %1244 = vmatprep.subr.bf16.mxu0 0
        %1245 = vmatpush1.bf16.msra.mxu0 0
        %1246 = vmatprep.subr.bf16.mxu0 0
        %1247 = vmatpush1.bf16.msra.mxu0 0
        %1248 = vmatprep.subr.bf16.mxu0 0
        %1249 = vmatpush1.bf16.msra.mxu0 0
        %1250 = vmatprep.subr.bf16.mxu0 0
        %1251 = vmatpush1.bf16.msra.mxu0 0
        %1252 = vmatprep.mubr.bf16.mxu0 0
        %1253 = vmatmul.mubr.bf16.gmra.mrb[0].mxu0 %v1215
        %v1254 = vpop.f32.mrb[0].mxu0
        %v1255 = vadd.f32 0.0, %v1254
        %v1256 = vpop.f32.mrb[0].mxu0
        %v1257 = vpop.f32.mrb[0].mxu0
        %v1258 = vpop.f32.mrb[0].mxu0
        %1259 = vdwg.mxu0
        %v1260 = vpack.c.bf16 %v1204, %v1204
        %v1262 = vsel %vm502, %v1260, 0
        %1264 = vmatprep.subr.bf16.mxu0 0
        %1265 = vmatpush1.bf16.msra.mxu0 %v1218
        %1266 = vmatprep.subr.bf16.mxu0 0
        %1267 = vmatpush1.bf16.msra.mxu0 0
        %1268 = vmatprep.subr.bf16.mxu0 0
        %1269 = vmatpush1.bf16.msra.mxu0 0
        %1270 = vmatprep.subr.bf16.mxu0 0
        %1271 = vmatpush1.bf16.msra.mxu0 0
        %1272 = vmatprep.subr.bf16.mxu0 0
        %1273 = vmatpush1.bf16.msra.mxu0 0
        %1274 = vmatprep.subr.bf16.mxu0 0
        %1275 = vmatpush1.bf16.msra.mxu0 0
        %1276 = vmatprep.subr.bf16.mxu0 0
        %1277 = vmatpush1.bf16.msra.mxu0 0
        %1278 = vmatprep.subr.bf16.mxu0 0
        %1279 = vmatpush1.bf16.msra.mxu0 0
        %1280 = vmatprep.subr.bf16.mxu0 0
        %1281 = vmatpush1.bf16.msra.mxu0 0
        %1282 = vmatprep.subr.bf16.mxu0 0
        %1283 = vmatpush1.bf16.msra.mxu0 0
        %1284 = vmatprep.subr.bf16.mxu0 0
        %1285 = vmatpush1.bf16.msra.mxu0 0
        %1286 = vmatprep.subr.bf16.mxu0 0
        %1287 = vmatpush1.bf16.msra.mxu0 0
        %1288 = vmatprep.subr.bf16.mxu0 0
        %1289 = vmatpush1.bf16.msra.mxu0 0
        %1290 = vmatprep.subr.bf16.mxu0 0
        %1291 = vmatpush1.bf16.msra.mxu0 0
        %1292 = vmatprep.subr.bf16.mxu0 0
        %1293 = vmatpush1.bf16.msra.mxu0 0
        %1294 = vmatprep.subr.bf16.mxu0 0
        %1295 = vmatpush1.bf16.msra.mxu0 0
        %1296 = vmatprep.mubr.bf16.mxu0 0
        %1297 = vmatmul.mubr.bf16.gmra.mrb[0].mxu0 %v1262
        %v1298 = vpop.f32.mrb[0].mxu0
        %v1299 = vadd.f32 0.0, %v1298
        %v1300 = vpop.f32.mrb[0].mxu0
        %v1301 = vpop.f32.mrb[0].mxu0
        %v1302 = vpop.f32.mrb[0].mxu0
        %1303 = vdwg.mxu0
        %1305 = vrot.lane.b32.xlu0 %v1299, 120
        %v1306 = vpop.permute.xlu0 %1305
        %v1308 = vsub.f32 %v1255, %v1306
        %1309 = vrot.lane.b32.xlu0 %v1299, 8
        %v1310 = vpop.permute.xlu0 %1309
        %v1312 = vadd.f32 %v1255, %v1310
        %1314 = vrot.lane.b32.xlu0 %v858, 8
        %v1315 = vpop.permute.xlu0 %1314
        %1318 = vrot.lane.b32.xlu0 %v1083, 16
        %v1319 = vpop.permute.xlu0 %1318
        %1322 = vrot.lane.b32.xlu0 %v1308, 24
        %v1323 = vpop.permute.xlu0 %1322
        %v1325 = vsel %vm502, %v623, %v1315
        %v1326 = vsel %vm412, %v1325, %v1319
        %vm1327 = vcmask 195584
        %v1328 = vsel %vm1327, %v1326, %v1323
        %vm1329 = vcmask 261120
        %1330 = vst.msk [vmem:[%s367] sm:$0xff] %vm1329, %v1328
        %1332 = vrot.lane.b32.xlu0 %v627, 120
        %v1333 = vpop.permute.xlu0 %1332
        %1336 = vrot.lane.b32.xlu0 %v1087, 8
        %v1337 = vpop.permute.xlu0 %1336
        %1340 = vrot.lane.b32.xlu0 %v1312, 16
        %v1341 = vpop.permute.xlu0 %1340
        %v1343 = vsel %vm502, %v1333, %v862
        %v1344 = vsel %vm412, %v1343, %v1337
        %v1345 = vsel %vm1327, %v1344, %v1341
        %1346 = vst.msk [vmem:[%s374] sm:$0xff] %vm1329, %v1345
        %v1347 = vld [vmem:[%s381] sm:$0xff]
        %v1348 = vmul.f32 %v1347, 0.25
        %1349 = vst.msk [vmem:[%s381] sm:$0xff] %vm502, %v1348
        %v1350 = vld [vmem:[%s388] sm:$0xff]
        %v1351 = vmul.f32 %v1350, 0.25
        %1352 = vst.msk [vmem:[%s388] sm:$0xff] %vm502, %v1351
        %s1353 = sand.u32 %s135, 1
        %s1354 = scalar_lea.sflag [#allocation4], %s1353
        %s1355 = sand.u32 %s135, 1
        %s1356 = smul.addr %s1355, 8
        %s1357 = scalar_lea.vmem [#allocation8], %s1356
        %s1358 = sand.u32 %s33, 1
        %s1359 = scalar_lea.sflag [#allocation10], %s1358
        %s1360 = sand.u32 %s163, 1
        %s1361 = smul.addr %s1360, 8
        %s1362 = scalar_lea.vmem [#allocation9], %s1361
        %s1363 = sand.u32 %s33, 1
        %s1364 = scalar_lea.sflag [#allocation10], %s1363
        %s1365 = sand.u32 %s191, 1
        %s1366 = smul.addr %s1365, 8
        %s1367 = scalar_lea.vmem [#allocation11], %s1366
        %s1368 = sand.u32 %s219, 1
        %s1369 = scalar_lea.sflag [#allocation13], %s1368
        %s1370 = sand.u32 %s219, 1
        %s1371 = smul.addr %s1370, 8
        %s1372 = scalar_lea.vmem [#allocation12], %s1371
        // Predicated region
        $region45: #{tpu_custom_call.1} parent=31 // pred_check
          %p1373 = pneg %p145
        $region46: #{tpu_custom_call.1} parent=31 // pred_check_branch
          %1375 = sbr.rel (%p1373) target = $region48
        $region47: #{tpu_custom_call.1} parent=31 // pred_region
          %s1377 = ssub.s32 128, 128
          %1378 = vsyncadd %s1354, %s1377
          %s1379 = sadd.s32 %s38, %s37
          %s1380 = smul.addr %s1379, 128
          %s1381 = scalar_lea.hbm %s3, %s1380
          %s1383 = sshll.u32 %s1357, 4
          %s1384 = int_to_ptr.vmem [resolvable:$true] %s1383
          %1386 = dma.vmem_to_hbm [thread:$0]  %s1384, 128, %s1381, %s1354
        $region48: #{tpu_custom_call.1} parent=31 // pred_fallthru
          _
        // Predicated region
        $region49: #{tpu_custom_call.1} parent=31 // pred_check
          %p1387 = pneg %p173
        $region50: #{tpu_custom_call.1} parent=31 // pred_check_branch
          %1389 = sbr.rel (%p1387) target = $region52
        $region51: #{tpu_custom_call.1} parent=31 // pred_region
          %s1391 = ssub.s32 128, 128
          %1392 = vsyncadd %s1359, %s1391
          %s1393 = sadd.s32 %s38, %s37
          %s1394 = smul.addr %s1393, 128
          %s1395 = scalar_lea.hbm %s4, %s1394
          %s1397 = sshll.u32 %s1362, 4
          %s1398 = int_to_ptr.vmem [resolvable:$true] %s1397
          %1400 = dma.vmem_to_hbm [thread:$0]  %s1398, 128, %s1395, %s1359
        $region52: #{tpu_custom_call.1} parent=31 // pred_fallthru
          _
        // Predicated region
        $region53: #{tpu_custom_call.1} parent=31 // pred_check
          %p1401 = pneg %p201
        $region54: #{tpu_custom_call.1} parent=31 // pred_check_branch
          %1403 = sbr.rel (%p1401) target = $region56
        $region55: #{tpu_custom_call.1} parent=31 // pred_region
          %s1405 = ssub.s32 128, 128
          %1406 = vsyncadd %s1364, %s1405
          %s1407 = sadd.s32 %s38, %s37
          %s1408 = smul.addr %s1407, 128
          %s1409 = scalar_lea.hbm %s5, %s1408
          %s1411 = sshll.u32 %s1367, 4
          %s1412 = int_to_ptr.vmem [resolvable:$true] %s1411
          %1414 = dma.vmem_to_hbm [thread:$0]  %s1412, 128, %s1409, %s1364
        $region56: #{tpu_custom_call.1} parent=31 // pred_fallthru
          _
        // Predicated region
        $region57: #{tpu_custom_call.1} parent=31 // pred_check
          %p1415 = pneg %p229
        $region58: #{tpu_custom_call.1} parent=31 // pred_check_branch
          %1417 = sbr.rel (%p1415) target = $region60
        $region59: #{tpu_custom_call.1} parent=31 // pred_region
          %s1419 = ssub.s32 128, 128
          %1420 = vsyncadd %s1369, %s1419
          %s1421 = sadd.s32 %s38, %s37
          %s1422 = smul.addr %s1421, 128
          %s1423 = scalar_lea.hbm %s6, %s1422
          %s1425 = sshll.u32 %s1372, 4
          %s1426 = int_to_ptr.vmem [resolvable:$true] %s1425
          %1428 = dma.vmem_to_hbm [thread:$0]  %s1426, 128, %s1423, %s1369
        $region60: #{tpu_custom_call.1} parent=31 // pred_fallthru
          _
      $region32: #{tpu_custom_call.1} parent=5 // pred_fallthru
        _
      %p1429 = scmp.le.s32.totalorder 2, %s28
      // Predicated region
      $region61: #{tpu_custom_call.1} parent=5 // pred_check
        %p1430 = pneg %p1429
      $region62: #{tpu_custom_call.1} parent=5 // pred_check_branch
        %1432 = sbr.rel (%p1430) target = $region64
      $region63: #{tpu_custom_call.1} parent=5 // pred_region
        %s1433 = ssub.s32 %s28, 2
        // Predicated region
        $region65: #{tpu_custom_call.1} parent=63 // pred_check
          %p1434 = pneg %p151
        $region66: #{tpu_custom_call.1} parent=63 // pred_check_branch
          %1436 = sbr.rel (%p1434) target = $region68
        $region67: #{tpu_custom_call.1} parent=63 // pred_region
          %s1437 = sand.u32 %s136, 1
          %s1438 = scalar_lea.sflag [#allocation4], %s1437
          %s1439 = sand.u32 %s136, 1
          %s1440 = smul.addr %s1439, 8
          %s1441 = scalar_lea.vmem [#allocation8], %s1440
          %1442 = dma.done %s1438, 128
        $region68: #{tpu_custom_call.1} parent=63 // pred_fallthru
          _
        // Predicated region
        $region69: #{tpu_custom_call.1} parent=63 // pred_check
          %p1443 = pneg %p179
        $region70: #{tpu_custom_call.1} parent=63 // pred_check_branch
          %1445 = sbr.rel (%p1443) target = $region72
        $region71: #{tpu_custom_call.1} parent=63 // pred_region
          %s1446 = sand.u32 %s34, 1
          %s1447 = scalar_lea.sflag [#allocation10], %s1446
          %s1448 = sand.u32 %s164, 1
          %s1449 = smul.addr %s1448, 8
          %s1450 = scalar_lea.vmem [#allocation9], %s1449
          %1451 = dma.done %s1447, 128
        $region72: #{tpu_custom_call.1} parent=63 // pred_fallthru
          _
        // Predicated region
        $region73: #{tpu_custom_call.1} parent=63 // pred_check
          %p1452 = pneg %p207
        $region74: #{tpu_custom_call.1} parent=63 // pred_check_branch
          %1454 = sbr.rel (%p1452) target = $region76
        $region75: #{tpu_custom_call.1} parent=63 // pred_region
          %s1455 = sand.u32 %s34, 1
          %s1456 = scalar_lea.sflag [#allocation10], %s1455
          %s1457 = sand.u32 %s192, 1
          %s1458 = smul.addr %s1457, 8
          %s1459 = scalar_lea.vmem [#allocation11], %s1458
          %1460 = dma.done %s1456, 128
        $region76: #{tpu_custom_call.1} parent=63 // pred_fallthru
          _
        // Predicated region
        $region77: #{tpu_custom_call.1} parent=63 // pred_check
          %p1461 = pneg %p235
        $region78: #{tpu_custom_call.1} parent=63 // pred_check_branch
          %1463 = sbr.rel (%p1461) target = $region80
        $region79: #{tpu_custom_call.1} parent=63 // pred_region
          %s1464 = sand.u32 %s220, 1
          %s1465 = scalar_lea.sflag [#allocation13], %s1464
          %s1466 = sand.u32 %s220, 1
          %s1467 = smul.addr %s1466, 8
          %s1468 = scalar_lea.vmem [#allocation12], %s1467
          %1469 = dma.done %s1465, 128
        $region80: #{tpu_custom_call.1} parent=63 // pred_fallthru
          _
      $region64: #{tpu_custom_call.1} parent=5 // pred_fallthru
        _
    $region6: #{tpu_custom_call.1} parent=1 // loop_footer
      %s32 = sadd.s32 1, %s28
    $region7: #{tpu_custom_call.1} parent=1 // loop_footer_branch
      %27 = sbr.rel target = $region3
    $region8: #{tpu_custom_call.1} parent=1 // loop_exit
      _
    %1470 = vsyncpa [#allocation3], 1
    %s1471 = scalar_lea.sflag [#allocation3], 1
    %1472 = vsyncpa %s1471, 1
    %1473 = vsyncpa [#allocation6], 1
    %s1474 = scalar_lea.sflag [#allocation6], 1
    %1475 = vsyncpa %s1474, 1
    %1476 = vsyncpa [#allocation4], 1
    %s1477 = scalar_lea.sflag [#allocation4], 1
    %1478 = vsyncpa %s1477, 1
    %1479 = vsyncpa [#allocation10], 1
    %s1480 = scalar_lea.sflag [#allocation10], 1
    %1481 = vsyncpa %s1480, 1
    %1482 = vsyncpa [#allocation13], 1
    %s1483 = scalar_lea.sflag [#allocation13], 1
    %1484 = vsyncpa %s1483, 1

</llo_original>
